<compile_context>
chip_gen: v5e
topology: v5e:2x2
jax: 0.10.0
libtpu: 0.0.40
codegen_flags: <defaults>
</compile_context>

<pallas_src>
import math

import jax
import jax.numpy as jnp
from jax import lax
from jax.experimental import pallas as pl
from jax.experimental.pallas import tpu as pltpu  # noqa: F401  (imported per template; not needed)

# ---- model hyper-params (CrossModalEncoder(dims=32)) ----
D, S, B, T = 32, 8, 2, 4     # dims, seq len, batch, bottleneck tokens
HEADS = 8
HD = D // HEADS              # head dim = 4
FFN_H = 4 * D                # ffn hidden = 128
G = 2 * B                    # lane groups: (a,b0) (a,b1) (b,b0) (b,b1)
GD = G * D                   # 128 lanes
GM12 = G * HEADS * S         # replicated key rows for att1/att2 = 256
GM34 = G * HEADS * T         # replicated key rows for att3/att4 = 128
EPS = 1e-5
SCALE = 1.0 / math.sqrt(HD)

# ---- wide slab (GD rows x WIDE_COLS lanes): column offsets, all multiples of 128 ----
WC_BAVG, WC_W12, WC_W34, WC_W1, WC_WO12M, WC_WO34 = 0, 128, 512, 896, 1408, 1536
WIDE_COLS = 1664
# ---- tall slab (TALL_ROWS rows x GD lanes): row offsets, all multiples of 8 ----
TR_W2, TR_MASK12, TR_MASK34, TR_REP12, TR_REP34 = 0, 512, 768, 896, 1152
TR_GAMMA1, TR_BETA1 = 1280, 1296
TR_PEBK12, TR_PEBQ34 = 1312, 1320
TR_TOKR, TR_TADD, TR_B1W, TR_VEC = 1328, 1336, 1344, 1352
TALL_ROWS = 1368


def sinusoidal_pe(seq_len, dims):
    pos = jnp.arange(seq_len, dtype=jnp.float32)[:, None]
    div = jnp.exp(jnp.arange(0, dims, 2, dtype=jnp.float32) * (-math.log(10000.0) / dims))
    pe = jnp.zeros((seq_len, dims), jnp.float32)
    pe = pe.at[:, 0::2].set(jnp.sin(pos * div))
    pe = pe.at[:, 1::2].set(jnp.cos(pos * div))
    return pe


# ----------------------------- Pallas kernel -----------------------------
def cross_modal_kernel(act_ref, wide_ref, tall_ref, out_ref):
    f32 = jnp.float32

    def vrow(k):                               # one packed (1, 128) bias / gamma / beta row
        return tall_ref[TR_VEC + k:TR_VEC + k + 1, :]

    def seg_ln(x, gamma, beta, avg):
        # Segmented LayerNorm over 32-lane blocks; block means via one matmul with the
        # block-average constant (MXU has plenty of slack at these sizes).
        mu = jnp.dot(x, avg, preferred_element_type=f32)
        xc = x - mu
        var = jnp.dot(xc * xc, avg, preferred_element_type=f32)
        return xc * lax.rsqrt(var + EPS) * gamma + beta

    def attention(q, k, v, rep, mask):
        # All groups & heads via masked wide matmuls: rows of kbd/vbd enumerate
        # (group, head, key); output lanes are (group, head, head_dim) = PyTorch concat order.
        kbd = jnp.dot(rep, k, preferred_element_type=f32) * mask
        vbd = jnp.dot(rep, v, preferred_element_type=f32) * mask
        s = lax.dot_general(q, kbd, (((1,), (1,)), ((), ())),
                            preferred_element_type=f32) * SCALE
        # Global per-row max shift (cancels within each head's softmax).  NOTE: less robust
        # than a per-head max if one head trails the row max by >~87 — impossible at these
        # weight scales, kept for simplicity (see review correctness note).
        s = s - jnp.max(s, axis=-1, keepdims=True)
        e = jnp.exp(s)
        num = jnp.dot(e, vbd, preferred_element_type=f32)    # softmax numerator @ V
        den = jnp.dot(e, mask, preferred_element_type=f32)   # per-lane softmax denominator
        # Exact divide kept: pl.reciprocal(approx=True) would loosen the 3e-4 check.
        return num / den

    bavg = wide_ref[:, WC_BAVG:WC_BAVG + GD]                  # (128,128) block-average const
    ab = act_ref[...]                                         # (S, 128) = [a_b0|a_b1|b_b0|b_b1]

    # ---- norm1 / norm2 (a, b) and norm3 (token) in ONE stacked segmented LayerNorm ----
    x1 = jnp.concatenate([ab, tall_ref[TR_TOKR:TR_TOKR + T, :]], axis=0)      # (12,128)
    d1 = seg_ln(x1, tall_ref[TR_GAMMA1:TR_GAMMA1 + S + T, :],
                tall_ref[TR_BETA1:TR_BETA1 + S + T, :], bavg)                 # [dab ; dt0_rep]

    # ---- att1 / att2: fused block-diagonal QKV projection (one matmul) ----
    p1 = jnp.dot(d1, wide_ref[:, WC_W12:WC_W12 + 3 * GD], preferred_element_type=f32)  # (12,384)
    q12 = p1[S:S + T, 0:GD] + vrow(0)                                   # tokens -> Q
    k12 = p1[0:S, GD:2 * GD] + tall_ref[TR_PEBK12:TR_PEBK12 + S, :]     # (da+pe)@Wk (pe folded)
    v12 = p1[0:S, 2 * GD:3 * GD] + vrow(1)                              # da -> V
    o12 = attention(q12, k12, v12,
                    tall_ref[TR_REP12:TR_REP12 + GM12, 0:S],
                    tall_ref[TR_MASK12:TR_MASK12 + GM12, :])            # (T,128)

    # ---- t = token + at + bt : out-projection + modality-sum + token add folded into 1 matmul
    t_rep = jnp.dot(o12, wide_ref[:, WC_WO12M:WC_WO12M + GD],
                    preferred_element_type=f32) + tall_ref[TR_TADD:TR_TADD + T, :]
    dt2 = seg_ln(t_rep, vrow(6), vrow(7), bavg)                         # norm4, (T,128)

    # ---- att3 / att4: fused block-diagonal QKV projection ----
    x2 = jnp.concatenate([d1[0:S, :], dt2], axis=0)                     # (12,128)
    p2 = jnp.dot(x2, wide_ref[:, WC_W34:WC_W34 + 3 * GD], preferred_element_type=f32)  # (12,384)
    q34 = p2[0:S, 0:GD] + tall_ref[TR_PEBQ34:TR_PEBQ34 + S, :]          # (da+pe)@Wq (pe folded)
    k34 = p2[S:S + T, GD:2 * GD] + vrow(2)
    v34 = p2[S:S + T, 2 * GD:3 * GD] + vrow(3)
    o34 = attention(q34, k34, v34,
                    tall_ref[TR_REP34:TR_REP34 + GM34, 0:T],
                    tall_ref[TR_MASK34:TR_MASK34 + GM34, :])            # (S,128)
    ab = ab + jnp.dot(o34, wide_ref[:, WC_WO34:WC_WO34 + GD],
                      preferred_element_type=f32) + vrow(4)

    # ---- FFNs: block-diagonal over the 4 lane groups (2 matmuls total) ----
    dab2 = seg_ln(ab, vrow(8), vrow(9), bavg)                           # norm5 / norm6
    b1 = tall_ref[TR_B1W:TR_B1W + G, :]
    b1w = jnp.concatenate([b1[0:1], b1[1:2], b1[2:3], b1[3:4]], axis=1)  # (1, 512)
    h = jnp.dot(dab2, wide_ref[:, WC_W1:WC_W1 + G * FFN_H], preferred_element_type=f32) + b1w
    h = jnp.maximum(h, 0.0)
    ab = ab + jnp.dot(h, tall_ref[TR_W2:TR_W2 + G * FFN_H, :],
                      preferred_element_type=f32) + vrow(5)

    # ---- fusion ('sum') + final LayerNorm ----
    xsum = ab[:, 0:B * D] + ab[:, B * D:2 * B * D]                      # (S, 64): a + b per batch
    out_ref[...] = seg_ln(xsum, vrow(10)[:, 0:B * D], vrow(11)[:, 0:B * D],
                          bavg[0:B * D, 0:B * D])


# ----------------------------- host-side packing -----------------------------
def pack_params(p):
    """Pack PyTorch-convention parameters + all constants into two lane-dense f32 slabs."""
    att, ffn, norm = p["att"], p["ffn"], p["norm"]
    pe = sinusoidal_pe(S, D)
    mods = [g // B for g in range(G)]           # modality per lane group: [0, 0, 1, 1]

    def block_diag(mats):
        rows = sum(m.shape[0] for m in mats)
        cols = sum(m.shape[1] for m in mats)
        out = jnp.zeros((rows, cols), jnp.float32)
        r = c = 0
        for m in mats:
            out = out.at[r:r + m.shape[0], c:c + m.shape[1]].set(m)
            r += m.shape[0]
            c += m.shape[1]
        return out

    def glanes(fn):                             # per-group (D,) vectors -> (GD,)
        return jnp.concatenate([fn(m) for m in mods])

    lane = jnp.arange(GD)
    bavg = (lane[:, None] // D == lane[None, :] // D).astype(jnp.float32) / D
    msum = (lane[:, None] % (B * D) == lane[None, :] % (B * D)).astype(jnp.float32)

    def qkv_block(ai):                          # fused [Q|K|V] block-diag in-projection
        def one(lo):
            return block_diag([att[ai + m]["in_w"][lo:lo + D].T for m in mods])
        return jnp.concatenate([one(0), one(D), one(2 * D)], axis=1)    # (GD, 3*GD)

    w12bd = qkv_block(0)
    w34bd = qkv_block(2)
    w1bd = block_diag([ffn[m]["w1"].T for m in mods])                   # (GD, G*FFN_H)
    w2bd = block_diag([ffn[m]["w2"].T for m in mods])                   # (G*FFN_H, GD)
    wo12m = block_diag([att[m]["out_w"].T for m in mods]) @ msum        # out-proj + modality sum
    wo34bd = block_diag([att[2 + m]["out_w"].T for m in mods])

    wide = jnp.concatenate([bavg, w12bd, w34bd, w1bd, wo12m, wo34bd], axis=1)
    assert wide.shape == (GD, WIDE_COLS), wide.shape

    def rep_mask(lk):                           # replication matrix + (group, head) lane mask
        gm = G * HEADS * lk
        r = jnp.arange(gm)
        rep = (r[:, None] % lk == jnp.arange(lk)[None, :]).astype(jnp.float32)
        mask = ((r[:, None] // (HEADS * lk) == lane[None, :] // D) &
                ((r[:, None] % (HEADS * lk)) // lk == (lane[None, :] % D) // HD)
                ).astype(jnp.float32)
        return rep, mask

    rep12, mask12 = rep_mask(S)
    rep34, mask34 = rep_mask(T)

    gamma1 = jnp.concatenate(
        [jnp.tile(glanes(lambda m: norm[m]["g"])[None, :], (S, 1)),
         jnp.tile(jnp.tile(norm[2]["g"], G)[None, :], (T, 1))], axis=0)
    beta1 = jnp.concatenate(
        [jnp.tile(glanes(lambda m: norm[m]["b"])[None, :], (S, 1)),
         jnp.tile(jnp.tile(norm[2]["b"], G)[None, :], (T, 1))], axis=0)

    # PE folded into the projection bias constants (exact: (x+pe)@W = x@W + pe@W).
    pebk12 = jnp.concatenate(
        [pe @ att[m]["in_w"][D:2 * D].T + att[m]["in_b"][D:2 * D] for m in mods], axis=1)
    pebq34 = jnp.concatenate(
        [pe @ att[2 + m]["in_w"][:D].T + att[2 + m]["in_b"][:D] for m in mods], axis=1)

    tokrep = jnp.tile(p["token"], (1, G))                               # (T, 128)
    tadd = tokrep + jnp.tile(att[0]["out_b"] + att[1]["out_b"], G)[None, :]
    b1w = jnp.stack([ffn[m]["b1"] for m in mods])                       # (G, FFN_H)

    vec = jnp.stack([
        glanes(lambda m: att[m]["in_b"][:D]),              # 0: att1/2 Q bias
        glanes(lambda m: att[m]["in_b"][2 * D:]),          # 1: att1/2 V bias
        glanes(lambda m: att[2 + m]["in_b"][D:2 * D]),     # 2: att3/4 K bias
        glanes(lambda m: att[2 + m]["in_b"][2 * D:]),      # 3: att3/4 V bias
        glanes(lambda m: att[2 + m]["out_b"]),             # 4: att3/4 out bias
        glanes(lambda m: ffn[m]["b2"]),                    # 5: ffn down-proj bias
        jnp.tile(norm[3]["g"], G),                         # 6: norm4 gamma
        jnp.tile(norm[3]["b"], G),                         # 7: norm4 beta
        glanes(lambda m: norm[4 + m]["g"]),                # 8: norm5/6 gamma
        glanes(lambda m: norm[4 + m]["b"]),                # 9: norm5/6 beta
        jnp.pad(jnp.tile(norm[6]["g"], B), (0, GD - B * D)),   # 10: final norm gamma
        jnp.pad(jnp.tile(norm[6]["b"], B), (0, GD - B * D)),   # 11: final norm beta
    ])

    tall = jnp.zeros((TALL_ROWS, GD), jnp.float32)
    for ofs, arr in ((TR_W2, w2bd), (TR_MASK12, mask12), (TR_MASK34, mask34),
                     (TR_REP12, rep12), (TR_REP34, rep34),
                     (TR_GAMMA1, gamma1), (TR_BETA1, beta1),
                     (TR_PEBK12, pebk12), (TR_PEBQ34, pebq34),
                     (TR_TOKR, tokrep), (TR_TADD, tadd), (TR_B1W, b1w),
                     (TR_VEC, vec)):
        tall = tall.at[ofs:ofs + arr.shape[0], :arr.shape[1]].set(arr)
    return wide, tall


# ----------------------------- wrapper -----------------------------
def cross_modal_encoder(a, b, params):
    assert a.shape == (B, S, D) and b.shape == (B, S, D), (a.shape, b.shape)
    # Activations pre-packed host-side: 4 (modality, batch) groups along lanes -> (S, 128).
    acts = jnp.concatenate([m[i] for m in (a, b) for i in range(B)], axis=-1)
    wide, tall = pack_params(params)
    out = pl.pallas_call(            # grid-less single invocation; whole problem lives in VMEM
        cross_modal_kernel,
        out_shape=jax.ShapeDtypeStruct((S, B * D), jnp.float32),
    )(acts, wide, tall)
    # Wrapper-side layout plumbing only: (S, B*D) lane-packed -> (B, S, D).
    return jnp.transpose(out.reshape(S, B, D), (1, 0, 2))


# ------------------ independent reference (PyTorch weight layout) ------------------
def _ref_layer_norm(x, g, beta):
    mu = jnp.mean(x, axis=-1, keepdims=True)
    var = jnp.mean((x - mu) ** 2, axis=-1, keepdims=True)
    return (x - mu) / jnp.sqrt(var + EPS) * g + beta


def _ref_mha(q_in, k_in, v_in, in_w, in_b, out_w, out_b):
    q = q_in @ in_w[:D].T + in_b[:D]
    k = k_in @ in_w[D:2 * D].T + in_b[D:2 * D]
    v = v_in @ in_w[2 * D:].T + in_b[2 * D:]
    Lq, Lk = q.shape[0], k.shape[0]
    qh = q.reshape(Lq, HEADS, HD).transpose(1, 0, 2)
    kh = k.reshape(Lk, HEADS, HD).transpose(1, 0, 2)
    vh = v.reshape(Lk, HEADS, HD).transpose(1, 0, 2)
    s = jnp.einsum('hqd,hkd->hqk', qh, kh) / math.sqrt(HD)
    p = jax.nn.softmax(s, axis=-1)
    o = jnp.einsum('hqk,hkd->hqd', p, vh).transpose(1, 0, 2).reshape(Lq, D)
    return o @ out_w.T + out_b


def reference_one(a, b, pe, p):
    def ln(x, i):
        n = p["norm"][i]
        return _ref_layer_norm(x, n["g"], n["b"])

    def mha(qx, kx, vx, i):
        m = p["att"][i]
        return _ref_mha(qx, kx, vx, m["in_w"], m["in_b"], m["out_w"], m["out_b"])

    def ffn(x, i):
        f = p["ffn"][i]
        h = jnp.maximum(x @ f["w1"].T + f["b1"], 0.0)
        return h @ f["w2"].T + f["b2"]

    t = p["token"]
    da, db, dt = ln(a, 0), ln(b, 1), ln(t, 2)
    t = t + mha(dt, da + pe, da, 0) + mha(dt, db + pe, db, 1)
    dt = ln(t, 3)
    a = a + mha(da + pe, dt, dt, 2)
    b = b + mha(db + pe, dt, dt, 3)
    a = a + ffn(ln(a, 4), 0)
    b = b + ffn(ln(b, 5), 1)
    return ln(a + b, 6)


def reference(a, b, params):
    pe = sinusoidal_pe(S, D)
    return jnp.stack([reference_one(a[i], b[i], pe, params) for i in range(a.shape[0])])


# ----------------------------- params -----------------------------
def init_params(key):
    keys = iter(jax.random.split(key, 64))

    def rnd(shape, scale=0.05):
        return jax.random.normal(next(keys), shape, jnp.float32) * scale

    att = [dict(in_w=rnd((3 * D, D)), in_b=rnd((3 * D,)),
                out_w=rnd((D, D)), out_b=rnd((D,))) for _ in range(4)]
    ffn = [dict(w1=rnd((FFN_H, D)), b1=rnd((FFN_H,)),
                w2=rnd((D, FFN_H)), b2=rnd((D,))) for _ in range(2)]
    norm = [dict(g=jnp.ones((D,), jnp.float32) + rnd((D,), 0.01),
                 b=rnd((D,), 0.01)) for _ in range(7)]
    return dict(token=rnd((T, D), 0.1), att=att, ffn=ffn, norm=norm)


if __name__ == "__main__":
    key = jax.random.PRNGKey(0)
    ka, kb, kp = jax.random.split(key, 3)
    a = jax.random.normal(ka, (B, S, D), jnp.float32)
    b = jax.random.normal(kb, (B, S, D), jnp.float32)
    params = init_params(kp)

    out = jax.block_until_ready(cross_modal_encoder(a, b, params))
    ref = jax.block_until_ready(reference(a, b, params))

    assert out.shape == (B, S, D), out.shape
    err = float(jnp.max(jnp.abs(out - ref)))
    assert jnp.allclose(out, ref, atol=3e-4, rtol=3e-4), f"max abs err = {err}"
    print("KERNEL_OK")
</pallas_src>

<mosaic_0001>
module attributes {stable_mosaic.version = 11 : i64} {
  func.func @cross_modal_kernel(%arg0: memref<8x128xf32, #tpu.memory_space<vmem>>, %arg1: memref<128x1664xf32, #tpu.memory_space<vmem>>, %arg2: memref<1368x128xf32, #tpu.memory_space<vmem>>, %arg3: memref<8x64xf32, #tpu.memory_space<vmem>>) attributes {dimension_semantics = [], scalar_prefetch = 0 : i64, scratch_operands = 0 : i64, tpu.core_type = #tpu.core_type<tc>} {
    %c0 = arith.constant 0 : index
    %c0_0 = arith.constant 0 : index
    %0 = vector.load %arg1[%c0, %c0_0] : memref<128x1664xf32, #tpu.memory_space<vmem>>, vector<128x128xf32>
    %c0_1 = arith.constant 0 : index
    %c0_2 = arith.constant 0 : index
    %1 = vector.load %arg0[%c0_1, %c0_2] : memref<8x128xf32, #tpu.memory_space<vmem>>, vector<8x128xf32>
    %c1328 = arith.constant 1328 : index
    %c0_3 = arith.constant 0 : index
    %2 = vector.load %arg2[%c1328, %c0_3] : memref<1368x128xf32, #tpu.memory_space<vmem>>, vector<4x128xf32>
    %3 = tpu.concatenate %1, %2 in 0 : vector<8x128xf32>, vector<4x128xf32> -> vector<12x128xf32>
    %c1280 = arith.constant 1280 : index
    %c0_4 = arith.constant 0 : index
    %4 = vector.load %arg2[%c1280, %c0_4] : memref<1368x128xf32, #tpu.memory_space<vmem>>, vector<12x128xf32>
    %c1296 = arith.constant 1296 : index
    %c0_5 = arith.constant 0 : index
    %5 = vector.load %arg2[%c1296, %c0_5] : memref<1368x128xf32, #tpu.memory_space<vmem>>, vector<12x128xf32>
    %cst = arith.constant dense<0.000000e+00> : vector<12x128xf32>
    %6 = tpu.matmul %3, %0, %cst {dimension_numbers = #tpu.dot_dimension_numbers<[1], [0], [0], [1], [0, 0, 1, 1], [], []>} : vector<12x128xf32>, vector<128x128xf32>, vector<12x128xf32> -> vector<12x128xf32>
    %7 = arith.subf %3, %6 : vector<12x128xf32>
    %8 = arith.mulf %7, %7 : vector<12x128xf32>
    %cst_6 = arith.constant dense<0.000000e+00> : vector<12x128xf32>
    %9 = tpu.matmul %8, %0, %cst_6 {dimension_numbers = #tpu.dot_dimension_numbers<[1], [0], [0], [1], [0, 0, 1, 1], [], []>} : vector<12x128xf32>, vector<128x128xf32>, vector<12x128xf32> -> vector<12x128xf32>
    %cst_7 = arith.constant 9.99999974E-6 : f32
    %10 = vector.broadcast %cst_7 : f32 to vector<12x128xf32>
    %11 = arith.addf %9, %10 : vector<12x128xf32>
    %12 = math.rsqrt %11 : vector<12x128xf32>
    %13 = arith.mulf %7, %12 : vector<12x128xf32>
    %14 = arith.mulf %13, %4 : vector<12x128xf32>
    %15 = arith.addf %14, %5 : vector<12x128xf32>
    %c0_8 = arith.constant 0 : index
    %c128 = arith.constant 128 : index
    %16 = vector.load %arg1[%c0_8, %c128] : memref<128x1664xf32, #tpu.memory_space<vmem>>, vector<128x384xf32>
    %cst_9 = arith.constant dense<0.000000e+00> : vector<12x384xf32>
    %17 = tpu.matmul %15, %16, %cst_9 {dimension_numbers = #tpu.dot_dimension_numbers<[1], [0], [0], [1], [0, 0, 1, 1], [], []>} : vector<12x128xf32>, vector<128x384xf32>, vector<12x384xf32> -> vector<12x384xf32>
    %18 = vector.extract_strided_slice %17 {offsets = [8, 0], sizes = [4, 128], strides = [1, 1]} : vector<12x384xf32> to vector<4x128xf32>
    %c1352 = arith.constant 1352 : index
    %c0_10 = arith.constant 0 : index
    %19 = vector.load %arg2[%c1352, %c0_10] : memref<1368x128xf32, #tpu.memory_space<vmem>>, vector<1x128xf32>
    %20 = vector.broadcast %19 : vector<1x128xf32> to vector<4x128xf32>
    %21 = arith.addf %18, %20 : vector<4x128xf32>
    %22 = vector.extract_strided_slice %17 {offsets = [0, 128], sizes = [8, 128], strides = [1, 1]} : vector<12x384xf32> to vector<8x128xf32>
    %c1312 = arith.constant 1312 : index
    %c0_11 = arith.constant 0 : index
    %23 = vector.load %arg2[%c1312, %c0_11] : memref<1368x128xf32, #tpu.memory_space<vmem>>, vector<8x128xf32>
    %24 = arith.addf %22, %23 : vector<8x128xf32>
    %25 = vector.extract_strided_slice %17 {offsets = [0, 256], sizes = [8, 128], strides = [1, 1]} : vector<12x384xf32> to vector<8x128xf32>
    %c1353 = arith.constant 1353 : index
    %c0_12 = arith.constant 0 : index
    %26 = vector.load %arg2[%c1353, %c0_12] : memref<1368x128xf32, #tpu.memory_space<vmem>>, vector<1x128xf32>
    %27 = vector.broadcast %26 : vector<1x128xf32> to vector<8x128xf32>
    %28 = arith.addf %25, %27 : vector<8x128xf32>
    %c896 = arith.constant 896 : index
    %c0_13 = arith.constant 0 : index
    %29 = vector.load %arg2[%c896, %c0_13] : memref<1368x128xf32, #tpu.memory_space<vmem>>, vector<256x8xf32>
    %c512 = arith.constant 512 : index
    %c0_14 = arith.constant 0 : index
    %30 = vector.load %arg2[%c512, %c0_14] : memref<1368x128xf32, #tpu.memory_space<vmem>>, vector<256x128xf32>
    %cst_15 = arith.constant dense<0.000000e+00> : vector<256x128xf32>
    %31 = tpu.matmul %29, %24, %cst_15 {dimension_numbers = #tpu.dot_dimension_numbers<[1], [0], [0], [1], [0, 0, 1, 1], [], []>} : vector<256x8xf32>, vector<8x128xf32>, vector<256x128xf32> -> vector<256x128xf32>
    %32 = arith.mulf %31, %30 : vector<256x128xf32>
    %cst_16 = arith.constant dense<0.000000e+00> : vector<256x128xf32>
    %33 = tpu.matmul %29, %28, %cst_16 {dimension_numbers = #tpu.dot_dimension_numbers<[1], [0], [0], [1], [0, 0, 1, 1], [], []>} : vector<256x8xf32>, vector<8x128xf32>, vector<256x128xf32> -> vector<256x128xf32>
    %34 = arith.mulf %33, %30 : vector<256x128xf32>
    %cst_17 = arith.constant dense<0.000000e+00> : vector<4x256xf32>
    %35 = tpu.matmul %21, %32, %cst_17 {dimension_numbers = #tpu.dot_dimension_numbers<[1], [1], [0], [0], [0, 0, 1, 0], [], []>} : vector<4x128xf32>, vector<256x128xf32>, vector<4x256xf32> -> vector<4x256xf32>
    %cst_18 = arith.constant 5.000000e-01 : f32
    %36 = vector.broadcast %cst_18 : f32 to vector<4x256xf32>
    %37 = arith.mulf %35, %36 : vector<4x256xf32>
    %cst_19 = arith.constant dense<0xFF800000> : vector<4xf32>
    %38 = vector.multi_reduction <maximumf>, %37, %cst_19 [1] : vector<4x256xf32> to vector<4xf32>
    %39 = vector.shape_cast %38 : vector<4xf32> to vector<4x1xf32>
    %40 = vector.broadcast %39 : vector<4x1xf32> to vector<4x256xf32>
    %41 = arith.subf %37, %40 : vector<4x256xf32>
    %42 = math.exp %41 : vector<4x256xf32>
    %cst_20 = arith.constant dense<0.000000e+00> : vector<4x128xf32>
    %43 = tpu.matmul %42, %34, %cst_20 {dimension_numbers = #tpu.dot_dimension_numbers<[1], [0], [0], [1], [0, 0, 1, 1], [], []>} : vector<4x256xf32>, vector<256x128xf32>, vector<4x128xf32> -> vector<4x128xf32>
    %cst_21 = arith.constant dense<0.000000e+00> : vector<4x128xf32>
    %44 = tpu.matmul %42, %30, %cst_21 {dimension_numbers = #tpu.dot_dimension_numbers<[1], [0], [0], [1], [0, 0, 1, 1], [], []>} : vector<4x256xf32>, vector<256x128xf32>, vector<4x128xf32> -> vector<4x128xf32>
    %45 = arith.divf %43, %44 : vector<4x128xf32>
    %c0_22 = arith.constant 0 : index
    %c1408 = arith.constant 1408 : index
    %46 = vector.load %arg1[%c0_22, %c1408] : memref<128x1664xf32, #tpu.memory_space<vmem>>, vector<128x128xf32>
    %cst_23 = arith.constant dense<0.000000e+00> : vector<4x128xf32>
    %47 = tpu.matmul %45, %46, %cst_23 {dimension_numbers = #tpu.dot_dimension_numbers<[1], [0], [0], [1], [0, 0, 1, 1], [], []>} : vector<4x128xf32>, vector<128x128xf32>, vector<4x128xf32> -> vector<4x128xf32>
    %c1336 = arith.constant 1336 : index
    %c0_24 = arith.constant 0 : index
    %48 = vector.load %arg2[%c1336, %c0_24] : memref<1368x128xf32, #tpu.memory_space<vmem>>, vector<4x128xf32>
    %49 = arith.addf %47, %48 : vector<4x128xf32>
    %c1358 = arith.constant 1358 : index
    %c0_25 = arith.constant 0 : index
    %50 = vector.load %arg2[%c1358, %c0_25] : memref<1368x128xf32, #tpu.memory_space<vmem>>, vector<1x128xf32>
    %c1359 = arith.constant 1359 : index
    %c0_26 = arith.constant 0 : index
    %51 = vector.load %arg2[%c1359, %c0_26] : memref<1368x128xf32, #tpu.memory_space<vmem>>, vector<1x128xf32>
    %cst_27 = arith.constant dense<0.000000e+00> : vector<4x128xf32>
    %52 = tpu.matmul %49, %0, %cst_27 {dimension_numbers = #tpu.dot_dimension_numbers<[1], [0], [0], [1], [0, 0, 1, 1], [], []>} : vector<4x128xf32>, vector<128x128xf32>, vector<4x128xf32> -> vector<4x128xf32>
    %53 = arith.subf %49, %52 : vector<4x128xf32>
    %54 = arith.mulf %53, %53 : vector<4x128xf32>
    %cst_28 = arith.constant dense<0.000000e+00> : vector<4x128xf32>
    %55 = tpu.matmul %54, %0, %cst_28 {dimension_numbers = #tpu.dot_dimension_numbers<[1], [0], [0], [1], [0, 0, 1, 1], [], []>} : vector<4x128xf32>, vector<128x128xf32>, vector<4x128xf32> -> vector<4x128xf32>
    %cst_29 = arith.constant 9.99999974E-6 : f32
    %56 = vector.broadcast %cst_29 : f32 to vector<4x128xf32>
    %57 = arith.addf %55, %56 : vector<4x128xf32>
    %58 = math.rsqrt %57 : vector<4x128xf32>
    %59 = arith.mulf %53, %58 : vector<4x128xf32>
    %60 = vector.broadcast %50 : vector<1x128xf32> to vector<4x128xf32>
    %61 = arith.mulf %59, %60 : vector<4x128xf32>
    %62 = vector.broadcast %51 : vector<1x128xf32> to vector<4x128xf32>
    %63 = arith.addf %61, %62 : vector<4x128xf32>
    %64 = vector.extract_strided_slice %15 {offsets = [0, 0], sizes = [8, 128], strides = [1, 1]} : vector<12x128xf32> to vector<8x128xf32>
    %65 = tpu.concatenate %64, %63 in 0 : vector<8x128xf32>, vector<4x128xf32> -> vector<12x128xf32>
    %c0_30 = arith.constant 0 : index
    %c512_31 = arith.constant 512 : index
    %66 = vector.load %arg1[%c0_30, %c512_31] : memref<128x1664xf32, #tpu.memory_space<vmem>>, vector<128x384xf32>
    %cst_32 = arith.constant dense<0.000000e+00> : vector<12x384xf32>
    %67 = tpu.matmul %65, %66, %cst_32 {dimension_numbers = #tpu.dot_dimension_numbers<[1], [0], [0], [1], [0, 0, 1, 1], [], []>} : vector<12x128xf32>, vector<128x384xf32>, vector<12x384xf32> -> vector<12x384xf32>
    %68 = vector.extract_strided_slice %67 {offsets = [0, 0], sizes = [8, 128], strides = [1, 1]} : vector<12x384xf32> to vector<8x128xf32>
    %c1320 = arith.constant 1320 : index
    %c0_33 = arith.constant 0 : index
    %69 = vector.load %arg2[%c1320, %c0_33] : memref<1368x128xf32, #tpu.memory_space<vmem>>, vector<8x128xf32>
    %70 = arith.addf %68, %69 : vector<8x128xf32>
    %71 = vector.extract_strided_slice %67 {offsets = [8, 128], sizes = [4, 128], strides = [1, 1]} : vector<12x384xf32> to vector<4x128xf32>
    %c1354 = arith.constant 1354 : index
    %c0_34 = arith.constant 0 : index
    %72 = vector.load %arg2[%c1354, %c0_34] : memref<1368x128xf32, #tpu.memory_space<vmem>>, vector<1x128xf32>
    %73 = vector.broadcast %72 : vector<1x128xf32> to vector<4x128xf32>
    %74 = arith.addf %71, %73 : vector<4x128xf32>
    %75 = vector.extract_strided_slice %67 {offsets = [8, 256], sizes = [4, 128], strides = [1, 1]} : vector<12x384xf32> to vector<4x128xf32>
    %c1355 = arith.constant 1355 : index
    %c0_35 = arith.constant 0 : index
    %76 = vector.load %arg2[%c1355, %c0_35] : memref<1368x128xf32, #tpu.memory_space<vmem>>, vector<1x128xf32>
    %77 = vector.broadcast %76 : vector<1x128xf32> to vector<4x128xf32>
    %78 = arith.addf %75, %77 : vector<4x128xf32>
    %c1152 = arith.constant 1152 : index
    %c0_36 = arith.constant 0 : index
    %79 = vector.load %arg2[%c1152, %c0_36] : memref<1368x128xf32, #tpu.memory_space<vmem>>, vector<128x4xf32>
    %c768 = arith.constant 768 : index
    %c0_37 = arith.constant 0 : index
    %80 = vector.load %arg2[%c768, %c0_37] : memref<1368x128xf32, #tpu.memory_space<vmem>>, vector<128x128xf32>
    %cst_38 = arith.constant dense<0.000000e+00> : vector<128x128xf32>
    %81 = tpu.matmul %79, %74, %cst_38 {dimension_numbers = #tpu.dot_dimension_numbers<[1], [0], [0], [1], [0, 0, 1, 1], [], []>} : vector<128x4xf32>, vector<4x128xf32>, vector<128x128xf32> -> vector<128x128xf32>
    %82 = arith.mulf %81, %80 : vector<128x128xf32>
    %cst_39 = arith.constant dense<0.000000e+00> : vector<128x128xf32>
    %83 = tpu.matmul %79, %78, %cst_39 {dimension_numbers = #tpu.dot_dimension_numbers<[1], [0], [0], [1], [0, 0, 1, 1], [], []>} : vector<128x4xf32>, vector<4x128xf32>, vector<128x128xf32> -> vector<128x128xf32>
    %84 = arith.mulf %83, %80 : vector<128x128xf32>
    %cst_40 = arith.constant dense<0.000000e+00> : vector<8x128xf32>
    %85 = tpu.matmul %70, %82, %cst_40 {dimension_numbers = #tpu.dot_dimension_numbers<[1], [1], [0], [0], [0, 0, 1, 0], [], []>} : vector<8x128xf32>, vector<128x128xf32>, vector<8x128xf32> -> vector<8x128xf32>
    %cst_41 = arith.constant 5.000000e-01 : f32
    %86 = vector.broadcast %cst_41 : f32 to vector<8x128xf32>
    %87 = arith.mulf %85, %86 : vector<8x128xf32>
    %cst_42 = arith.constant dense<0xFF800000> : vector<8xf32>
    %88 = vector.multi_reduction <maximumf>, %87, %cst_42 [1] : vector<8x128xf32> to vector<8xf32>
    %89 = vector.shape_cast %88 : vector<8xf32> to vector<8x1xf32>
    %90 = vector.broadcast %89 : vector<8x1xf32> to vector<8x128xf32>
    %91 = arith.subf %87, %90 : vector<8x128xf32>
    %92 = math.exp %91 : vector<8x128xf32>
    %cst_43 = arith.constant dense<0.000000e+00> : vector<8x128xf32>
    %93 = tpu.matmul %92, %84, %cst_43 {dimension_numbers = #tpu.dot_dimension_numbers<[1], [0], [0], [1], [0, 0, 1, 1], [], []>} : vector<8x128xf32>, vector<128x128xf32>, vector<8x128xf32> -> vector<8x128xf32>
    %cst_44 = arith.constant dense<0.000000e+00> : vector<8x128xf32>
    %94 = tpu.matmul %92, %80, %cst_44 {dimension_numbers = #tpu.dot_dimension_numbers<[1], [0], [0], [1], [0, 0, 1, 1], [], []>} : vector<8x128xf32>, vector<128x128xf32>, vector<8x128xf32> -> vector<8x128xf32>
    %95 = arith.divf %93, %94 : vector<8x128xf32>
    %c0_45 = arith.constant 0 : index
    %c1536 = arith.constant 1536 : index
    %96 = vector.load %arg1[%c0_45, %c1536] : memref<128x1664xf32, #tpu.memory_space<vmem>>, vector<128x128xf32>
    %cst_46 = arith.constant dense<0.000000e+00> : vector<8x128xf32>
    %97 = tpu.matmul %95, %96, %cst_46 {dimension_numbers = #tpu.dot_dimension_numbers<[1], [0], [0], [1], [0, 0, 1, 1], [], []>} : vector<8x128xf32>, vector<128x128xf32>, vector<8x128xf32> -> vector<8x128xf32>
    %98 = arith.addf %1, %97 : vector<8x128xf32>
    %c1356 = arith.constant 1356 : index
    %c0_47 = arith.constant 0 : index
    %99 = vector.load %arg2[%c1356, %c0_47] : memref<1368x128xf32, #tpu.memory_space<vmem>>, vector<1x128xf32>
    %100 = vector.broadcast %99 : vector<1x128xf32> to vector<8x128xf32>
    %101 = arith.addf %98, %100 : vector<8x128xf32>
    %c1360 = arith.constant 1360 : index
    %c0_48 = arith.constant 0 : index
    %102 = vector.load %arg2[%c1360, %c0_48] : memref<1368x128xf32, #tpu.memory_space<vmem>>, vector<1x128xf32>
    %c1361 = arith.constant 1361 : index
    %c0_49 = arith.constant 0 : index
    %103 = vector.load %arg2[%c1361, %c0_49] : memref<1368x128xf32, #tpu.memory_space<vmem>>, vector<1x128xf32>
    %cst_50 = arith.constant dense<0.000000e+00> : vector<8x128xf32>
    %104 = tpu.matmul %101, %0, %cst_50 {dimension_numbers = #tpu.dot_dimension_numbers<[1], [0], [0], [1], [0, 0, 1, 1], [], []>} : vector<8x128xf32>, vector<128x128xf32>, vector<8x128xf32> -> vector<8x128xf32>
    %105 = arith.subf %101, %104 : vector<8x128xf32>
    %106 = arith.mulf %105, %105 : vector<8x128xf32>
    %cst_51 = arith.constant dense<0.000000e+00> : vector<8x128xf32>
    %107 = tpu.matmul %106, %0, %cst_51 {dimension_numbers = #tpu.dot_dimension_numbers<[1], [0], [0], [1], [0, 0, 1, 1], [], []>} : vector<8x128xf32>, vector<128x128xf32>, vector<8x128xf32> -> vector<8x128xf32>
    %cst_52 = arith.constant 9.99999974E-6 : f32
    %108 = vector.broadcast %cst_52 : f32 to vector<8x128xf32>
    %109 = arith.addf %107, %108 : vector<8x128xf32>
    %110 = math.rsqrt %109 : vector<8x128xf32>
    %111 = arith.mulf %105, %110 : vector<8x128xf32>
    %112 = vector.broadcast %102 : vector<1x128xf32> to vector<8x128xf32>
    %113 = arith.mulf %111, %112 : vector<8x128xf32>
    %114 = vector.broadcast %103 : vector<1x128xf32> to vector<8x128xf32>
    %115 = arith.addf %113, %114 : vector<8x128xf32>
    %c1344 = arith.constant 1344 : index
    %c0_53 = arith.constant 0 : index
    %116 = vector.load %arg2[%c1344, %c0_53] : memref<1368x128xf32, #tpu.memory_space<vmem>>, vector<4x128xf32>
    %117 = vector.extract_strided_slice %116 {offsets = [0, 0], sizes = [1, 128], strides = [1, 1]} : vector<4x128xf32> to vector<1x128xf32>
    %118 = vector.extract_strided_slice %116 {offsets = [1, 0], sizes = [1, 128], strides = [1, 1]} : vector<4x128xf32> to vector<1x128xf32>
    %119 = vector.extract_strided_slice %116 {offsets = [2, 0], sizes = [1, 128], strides = [1, 1]} : vector<4x128xf32> to vector<1x128xf32>
    %120 = vector.extract_strided_slice %116 {offsets = [3, 0], sizes = [1, 128], strides = [1, 1]} : vector<4x128xf32> to vector<1x128xf32>
    %121 = tpu.concatenate %117, %118, %119, %120 in 1 : vector<1x128xf32>, vector<1x128xf32>, vector<1x128xf32>, vector<1x128xf32> -> vector<1x512xf32>
    %c0_54 = arith.constant 0 : index
    %c896_55 = arith.constant 896 : index
    %122 = vector.load %arg1[%c0_54, %c896_55] : memref<128x1664xf32, #tpu.memory_space<vmem>>, vector<128x512xf32>
    %cst_56 = arith.constant dense<0.000000e+00> : vector<8x512xf32>
    %123 = tpu.matmul %115, %122, %cst_56 {dimension_numbers = #tpu.dot_dimension_numbers<[1], [0], [0], [1], [0, 0, 1, 1], [], []>} : vector<8x128xf32>, vector<128x512xf32>, vector<8x512xf32> -> vector<8x512xf32>
    %124 = vector.broadcast %121 : vector<1x512xf32> to vector<8x512xf32>
    %125 = arith.addf %123, %124 : vector<8x512xf32>
    %cst_57 = arith.constant 0.000000e+00 : f32
    %126 = vector.broadcast %cst_57 : f32 to vector<8x512xf32>
    %127 = arith.maximumf %125, %126 : vector<8x512xf32>
    %c0_58 = arith.constant 0 : index
    %c0_59 = arith.constant 0 : index
    %128 = vector.load %arg2[%c0_58, %c0_59] : memref<1368x128xf32, #tpu.memory_space<vmem>>, vector<512x128xf32>
    %cst_60 = arith.constant dense<0.000000e+00> : vector<8x128xf32>
    %129 = tpu.matmul %127, %128, %cst_60 {dimension_numbers = #tpu.dot_dimension_numbers<[1], [0], [0], [1], [0, 0, 1, 1], [], []>} : vector<8x512xf32>, vector<512x128xf32>, vector<8x128xf32> -> vector<8x128xf32>
    %130 = arith.addf %101, %129 : vector<8x128xf32>
    %c1357 = arith.constant 1357 : index
    %c0_61 = arith.constant 0 : index
    %131 = vector.load %arg2[%c1357, %c0_61] : memref<1368x128xf32, #tpu.memory_space<vmem>>, vector<1x128xf32>
    %132 = vector.broadcast %131 : vector<1x128xf32> to vector<8x128xf32>
    %133 = arith.addf %130, %132 : vector<8x128xf32>
    %134 = vector.extract_strided_slice %133 {offsets = [0, 0], sizes = [8, 64], strides = [1, 1]} : vector<8x128xf32> to vector<8x64xf32>
    %135 = vector.extract_strided_slice %133 {offsets = [0, 64], sizes = [8, 64], strides = [1, 1]} : vector<8x128xf32> to vector<8x64xf32>
    %136 = arith.addf %134, %135 : vector<8x64xf32>
    %c1362 = arith.constant 1362 : index
    %c0_62 = arith.constant 0 : index
    %137 = vector.load %arg2[%c1362, %c0_62] : memref<1368x128xf32, #tpu.memory_space<vmem>>, vector<1x128xf32>
    %138 = vector.extract_strided_slice %137 {offsets = [0, 0], sizes = [1, 64], strides = [1, 1]} : vector<1x128xf32> to vector<1x64xf32>
    %c1363 = arith.constant 1363 : index
    %c0_63 = arith.constant 0 : index
    %139 = vector.load %arg2[%c1363, %c0_63] : memref<1368x128xf32, #tpu.memory_space<vmem>>, vector<1x128xf32>
    %140 = vector.extract_strided_slice %139 {offsets = [0, 0], sizes = [1, 64], strides = [1, 1]} : vector<1x128xf32> to vector<1x64xf32>
    %141 = vector.extract_strided_slice %0 {offsets = [0, 0], sizes = [64, 64], strides = [1, 1]} : vector<128x128xf32> to vector<64x64xf32>
    %cst_64 = arith.constant dense<0.000000e+00> : vector<8x64xf32>
    %142 = tpu.matmul %136, %141, %cst_64 {dimension_numbers = #tpu.dot_dimension_numbers<[1], [0], [0], [1], [0, 0, 1, 1], [], []>} : vector<8x64xf32>, vector<64x64xf32>, vector<8x64xf32> -> vector<8x64xf32>
    %143 = arith.subf %136, %142 : vector<8x64xf32>
    %144 = arith.mulf %143, %143 : vector<8x64xf32>
    %cst_65 = arith.constant dense<0.000000e+00> : vector<8x64xf32>
    %145 = tpu.matmul %144, %141, %cst_65 {dimension_numbers = #tpu.dot_dimension_numbers<[1], [0], [0], [1], [0, 0, 1, 1], [], []>} : vector<8x64xf32>, vector<64x64xf32>, vector<8x64xf32> -> vector<8x64xf32>
    %cst_66 = arith.constant 9.99999974E-6 : f32
    %146 = vector.broadcast %cst_66 : f32 to vector<8x64xf32>
    %147 = arith.addf %145, %146 : vector<8x64xf32>
    %148 = math.rsqrt %147 : vector<8x64xf32>
    %149 = arith.mulf %143, %148 : vector<8x64xf32>
    %150 = vector.broadcast %138 : vector<1x64xf32> to vector<8x64xf32>
    %151 = arith.mulf %149, %150 : vector<8x64xf32>
    %152 = vector.broadcast %140 : vector<1x64xf32> to vector<8x64xf32>
    %153 = arith.addf %151, %152 : vector<8x64xf32>
    %c0_67 = arith.constant 0 : index
    %c0_68 = arith.constant 0 : index
    %154 = vector.load %arg3[%c0_67, %c0_68] : memref<8x64xf32, #tpu.memory_space<vmem>>, vector<8x64xf32>
    tpu.vector_store %arg3[%c0_67, %c0_68], %153 {strides = array<i32>} : memref<8x64xf32, #tpu.memory_space<vmem>>, vector<8x64xf32>,
    return
  }
}

</mosaic_0001>

<llo_original>
// kernel: tpu_custom_call.1
$region0: #{tpu_custom_call.1}
  #allocation0 [shape = 'u32[]', space=smem, size = 0x4, offset = 0x4, fixed_abs, tag = 'smem constant byte address 0x4 - core index']
  #allocation1 [shape = 'u32[72,128]{1,0:T(1,128)}', space=vmem, size = 0x9000, scoped, tag = 'internal scratch']
  %s0 = inlined_call_operand.hbm [shape: f32[8,128], index: 0, kind: input, shape index: {}]
  %s1 = inlined_call_operand.hbm [shape: f32[128,1664], index: 1, kind: input, shape index: {}]
  %s2 = inlined_call_operand.hbm [shape: f32[1368,128], index: 2, kind: input, shape index: {}]
  %s3 = inlined_call_operand.hbm [shape: f32[8,64], index: 3, kind: output, shape index: {}]
  %s4 = sld [smem:[#allocation0]]
  $region34: #{tpu_custom_call.1} parent=0
    _
  %s6 = ssub.s32 1, %s4
  %s7 = scalar_select 0, %s6, %s4
  $region1: #{tpu_custom_call.1} parent=0
    #allocation2 [shape = 'u8[4096]{0}', space=vmem, size = 0x1000, scoped, tag = 'input window, operand 0, single buffered']
    #allocation3 [shape = 's32[1]{0}', space=sflag, size = 0x4, scoped, tag = 'scoped memory for tpu_custom_call.1']
    #allocation4 [shape = 's32[1]{0}', space=sflag, size = 0x4, scoped, tag = 'scoped memory for tpu_custom_call.1']
    #allocation5 [shape = 'u8[851968]{0}', space=vmem, size = 0xd0000, scoped, tag = 'input window, operand 1, single buffered']
    #allocation6 [shape = 's32[1]{0}', space=sflag, size = 0x4, scoped, tag = 'scoped memory for tpu_custom_call.1']
    #allocation7 [shape = 'u8[700416]{0}', space=vmem, size = 0xab000, scoped, tag = 'input window, operand 2, single buffered']
    #allocation8 [shape = 'u8[4096]{0}', space=vmem, size = 0x1000, scoped, tag = 'output window, operand 0, single buffered']
    %8 = vsyncpa [#allocation3], 0
    %9 = vsyncpa [#allocation6], 0
    %10 = vsyncpa [#allocation4], 0
    // Predicated region
    $region2: #{tpu_custom_call.1} parent=1 // pred_check
      _
    $region3: #{tpu_custom_call.1} parent=1 // pred_check_branch
      %12 = sbr.rel (0) target = $region5
    $region4: #{tpu_custom_call.1} parent=1 // pred_region
      %14 = vsyncadd [#allocation3], 0
      %s16 = sshll.u32 %s0, 4
      %s17 = int_to_ptr.hbm [resolvable:$true] %s16
      %s18 = sshll.u32 [#allocation2], 4
      %s19 = int_to_ptr.vmem [resolvable:$true] %s18
      %21 = dma.hbm_to_vmem [thread:$0]  %s17, 128, %s19, [#allocation3]
    $region5: #{tpu_custom_call.1} parent=1 // pred_fallthru
      _
    // Predicated region
    $region6: #{tpu_custom_call.1} parent=1 // pred_check
      _
    $region7: #{tpu_custom_call.1} parent=1 // pred_check_branch
      %23 = sbr.rel (0) target = $region9
    $region8: #{tpu_custom_call.1} parent=1 // pred_region
      %25 = vsyncadd [#allocation6], 0
      %s26 = sshll.u32 %s1, 4
      %s27 = int_to_ptr.hbm [resolvable:$true] %s26
      %s28 = sshll.u32 [#allocation5], 4
      %s29 = int_to_ptr.vmem [resolvable:$true] %s28
      %34 = dma.hbm_to_vmem [thread:$0]  %s27, 26624, %s29, [#allocation6], 1664, 1664, 104
    $region9: #{tpu_custom_call.1} parent=1 // pred_fallthru
      _
    // Predicated region
    $region10: #{tpu_custom_call.1} parent=1 // pred_check
      _
    $region11: #{tpu_custom_call.1} parent=1 // pred_check_branch
      %36 = sbr.rel (0) target = $region13
    $region12: #{tpu_custom_call.1} parent=1 // pred_region
      %38 = vsyncadd [#allocation6], 0
      %s39 = sshll.u32 %s2, 4
      %s40 = int_to_ptr.hbm [resolvable:$true] %s39
      %s41 = sshll.u32 [#allocation7], 4
      %s42 = int_to_ptr.vmem [resolvable:$true] %s41
      %47 = dma.hbm_to_vmem [thread:$0]  %s40, 21888, %s42, [#allocation6], 128, 128, 8
    $region13: #{tpu_custom_call.1} parent=1 // pred_fallthru
      _
    // Predicated region
    $region14: #{tpu_custom_call.1} parent=1 // pred_check
      _
    $region15: #{tpu_custom_call.1} parent=1 // pred_check_branch
      %49 = sbr.rel (0) target = $region17
    $region16: #{tpu_custom_call.1} parent=1 // pred_region
      %51 = dma.done [#allocation3], 128
    $region17: #{tpu_custom_call.1} parent=1 // pred_fallthru
      _
    // Predicated region
    $region18: #{tpu_custom_call.1} parent=1 // pred_check
      _
    $region19: #{tpu_custom_call.1} parent=1 // pred_check_branch
      %53 = sbr.rel (0) target = $region21
    $region20: #{tpu_custom_call.1} parent=1 // pred_region
      %55 = dma.done [#allocation6], 26624
    $region21: #{tpu_custom_call.1} parent=1 // pred_fallthru
      _
    // Predicated region
    $region22: #{tpu_custom_call.1} parent=1 // pred_check
      _
    $region23: #{tpu_custom_call.1} parent=1 // pred_check_branch
      %57 = sbr.rel (0) target = $region25
    $region24: #{tpu_custom_call.1} parent=1 // pred_region
      %59 = dma.done [#allocation6], 21888
    $region25: #{tpu_custom_call.1} parent=1 // pred_fallthru
      _
    %v60 = vld [vmem:[#allocation5] sm:$0xff]
    %v61 = vld [vmem:[#allocation5 + $0x68] sm:$0xff]
    %v62 = vld [vmem:[#allocation5 + $0xd0] sm:$0xff]
    %v63 = vld [vmem:[#allocation5 + $0x138] sm:$0xff]
    %v64 = vld [vmem:[#allocation5 + $0x1a0] sm:$0xff]
    %v65 = vld [vmem:[#allocation5 + $0x208] sm:$0xff]
    %v66 = vld [vmem:[#allocation5 + $0x270] sm:$0xff]
    %v67 = vld [vmem:[#allocation5 + $0x2d8] sm:$0xff]
    %v68 = vld [vmem:[#allocation5 + $0x340] sm:$0xff]
    %v69 = vld [vmem:[#allocation5 + $0x3a8] sm:$0xff]
    %v70 = vld [vmem:[#allocation5 + $0x410] sm:$0xff]
    %v71 = vld [vmem:[#allocation5 + $0x478] sm:$0xff]
    %v72 = vld [vmem:[#allocation5 + $0x4e0] sm:$0xff]
    %v73 = vld [vmem:[#allocation5 + $0x548] sm:$0xff]
    %v74 = vld [vmem:[#allocation5 + $0x5b0] sm:$0xff]
    %v75 = vld [vmem:[#allocation5 + $0x618] sm:$0xff]
    %v76 = vld [vmem:[#allocation2] sm:$0xff]
    %v77 = vld [vmem:[#allocation7 + $0x530] sm:$0xf]
    %v78 = vld [vmem:[#allocation7 + $0x500] sm:$0xff]
    %v79 = vld [vmem:[#allocation7 + $0x508] sm:$0xf]
    %v80 = vld [vmem:[#allocation7 + $0x510] sm:$0xff]
    %v81 = vld [vmem:[#allocation7 + $0x518] sm:$0xf]
    %82 = vmatpush.msra.mxu0 %v75
    %83 = vmatpush.msra.mxu0 %v74
    %84 = vmatpush.msra.mxu0 %v73
    %85 = vmatpush.msra.mxu0 %v72
    %86 = vmatpush.msra.mxu0 %v71
    %87 = vmatpush.msra.mxu0 %v70
    %88 = vmatpush.msra.mxu0 %v69
    %89 = vmatpush.msra.mxu0 %v68
    %90 = vmatpush.msra.mxu0 %v67
    %91 = vmatpush.msra.mxu0 %v66
    %92 = vmatpush.msra.mxu0 %v65
    %93 = vmatpush.msra.mxu0 %v64
    %94 = vmatpush.msra.mxu0 %v63
    %95 = vmatpush.msra.mxu0 %v62
    %96 = vmatpush.msra.mxu0 %v61
    %97 = vmatpush.msra.mxu0 %v60
    %98 = vmatmul.f32.gmra.mxu0 %v76
    %v99 = vpop.f32.mrf.mxu0
    %v100 = vadd.f32 0.0, %v99
    %101 = vmatmul.f32.gmra.mxu0 %v77
    %v102 = vpop.f32.mrf.mxu0
    %v103 = vadd.f32 0.0, %v102
    %104 = vdwg.mxu0
    %v105 = vsub.f32 %v76, %v100
    %v106 = vsub.f32 %v77, %v103
    %v107 = vmul.f32 %v105, %v105
    %v108 = vmul.f32 %v106, %v106
    %109 = vmatpush.msra.mxu0 %v75
    %110 = vmatpush.msra.mxu0 %v74
    %111 = vmatpush.msra.mxu0 %v73
    %112 = vmatpush.msra.mxu0 %v72
    %113 = vmatpush.msra.mxu0 %v71
    %114 = vmatpush.msra.mxu0 %v70
    %115 = vmatpush.msra.mxu0 %v69
    %116 = vmatpush.msra.mxu0 %v68
    %117 = vmatpush.msra.mxu0 %v67
    %118 = vmatpush.msra.mxu0 %v66
    %119 = vmatpush.msra.mxu0 %v65
    %120 = vmatpush.msra.mxu0 %v64
    %121 = vmatpush.msra.mxu0 %v63
    %122 = vmatpush.msra.mxu0 %v62
    %123 = vmatpush.msra.mxu0 %v61
    %124 = vmatpush.msra.mxu0 %v60
    %125 = vmatmul.f32.gmra.mxu0 %v107
    %v126 = vpop.f32.mrf.mxu0
    %v127 = vadd.f32 1e-05, %v126
    %128 = vmatmul.f32.gmra.mxu0 %v108
    %v129 = vpop.f32.mrf.mxu0
    %v130 = vadd.f32 1e-05, %v129
    %131 = vdwg.mxu0
    %v132 = vrsqrt.pop %v127
    %v133 = vmul.f32 %v132, %v127
    %v134 = vmul.f32 %v133, %v132
    %v135 = vmul.f32 0.5, %v134
    %v136 = vsub.f32 1.5, %v135
    %v137 = vmul.f32 %v132, %v136
    %vm138 = vweird.f32 %v127
    %vm139 = vweird.f32 %v132
    %vm140 = vmor %vm138, %vm139
    %v141 = vsel %vm140, %v132, %v137
    %v142 = vrsqrt.pop %v130
    %v143 = vmul.f32 %v142, %v130
    %v144 = vmul.f32 %v143, %v142
    %v145 = vmul.f32 0.5, %v144
    %v146 = vsub.f32 1.5, %v145
    %v147 = vmul.f32 %v142, %v146
    %vm148 = vweird.f32 %v130
    %vm149 = vweird.f32 %v142
    %vm150 = vmor %vm148, %vm149
    %v151 = vsel %vm150, %v142, %v147
    %v152 = vmul.f32 %v105, %v141
    %v153 = vmul.f32 %v106, %v151
    %v154 = vmul.f32 %v152, %v78
    %v155 = vmul.f32 %v153, %v79
    %v156 = vadd.f32 %v154, %v80
    %v157 = vadd.f32 %v155, %v81
    %v158 = vld [vmem:[#allocation5 + $0x8] sm:$0xff]
    %v159 = vld [vmem:[#allocation5 + $0x10] sm:$0xff]
    %v160 = vld [vmem:[#allocation5 + $0x18] sm:$0xff]
    %v161 = vld [vmem:[#allocation5 + $0x70] sm:$0xff]
    %v162 = vld [vmem:[#allocation5 + $0x78] sm:$0xff]
    %v163 = vld [vmem:[#allocation5 + $0x80] sm:$0xff]
    %v164 = vld [vmem:[#allocation5 + $0xd8] sm:$0xff]
    %v165 = vld [vmem:[#allocation5 + $0xe0] sm:$0xff]
    %v166 = vld [vmem:[#allocation5 + $0xe8] sm:$0xff]
    %v167 = vld [vmem:[#allocation5 + $0x140] sm:$0xff]
    %v168 = vld [vmem:[#allocation5 + $0x148] sm:$0xff]
    %v169 = vld [vmem:[#allocation5 + $0x150] sm:$0xff]
    %v170 = vld [vmem:[#allocation5 + $0x1a8] sm:$0xff]
    %v171 = vld [vmem:[#allocation5 + $0x1b0] sm:$0xff]
    %v172 = vld [vmem:[#allocation5 + $0x1b8] sm:$0xff]
    %v173 = vld [vmem:[#allocation5 + $0x210] sm:$0xff]
    %v174 = vld [vmem:[#allocation5 + $0x218] sm:$0xff]
    %v175 = vld [vmem:[#allocation5 + $0x220] sm:$0xff]
    %v176 = vld [vmem:[#allocation5 + $0x278] sm:$0xff]
    %v177 = vld [vmem:[#allocation5 + $0x280] sm:$0xff]
    %v178 = vld [vmem:[#allocation5 + $0x288] sm:$0xff]
    %v179 = vld [vmem:[#allocation5 + $0x2e0] sm:$0xff]
    %v180 = vld [vmem:[#allocation5 + $0x2e8] sm:$0xff]
    %v181 = vld [vmem:[#allocation5 + $0x2f0] sm:$0xff]
    %v182 = vld [vmem:[#allocation5 + $0x348] sm:$0xff]
    %v183 = vld [vmem:[#allocation5 + $0x350] sm:$0xff]
    %v184 = vld [vmem:[#allocation5 + $0x358] sm:$0xff]
    %v185 = vld [vmem:[#allocation5 + $0x3b0] sm:$0xff]
    %v186 = vld [vmem:[#allocation5 + $0x3b8] sm:$0xff]
    %v187 = vld [vmem:[#allocation5 + $0x3c0] sm:$0xff]
    %v188 = vld [vmem:[#allocation5 + $0x418] sm:$0xff]
    %v189 = vld [vmem:[#allocation5 + $0x420] sm:$0xff]
    %v190 = vld [vmem:[#allocation5 + $0x428] sm:$0xff]
    %v191 = vld [vmem:[#allocation5 + $0x480] sm:$0xff]
    %v192 = vld [vmem:[#allocation5 + $0x488] sm:$0xff]
    %v193 = vld [vmem:[#allocation5 + $0x490] sm:$0xff]
    %v194 = vld [vmem:[#allocation5 + $0x4e8] sm:$0xff]
    %v195 = vld [vmem:[#allocation5 + $0x4f0] sm:$0xff]
    %v196 = vld [vmem:[#allocation5 + $0x4f8] sm:$0xff]
    %v197 = vld [vmem:[#allocation5 + $0x550] sm:$0xff]
    %v198 = vld [vmem:[#allocation5 + $0x558] sm:$0xff]
    %v199 = vld [vmem:[#allocation5 + $0x560] sm:$0xff]
    %v200 = vld [vmem:[#allocation5 + $0x5b8] sm:$0xff]
    %v201 = vld [vmem:[#allocation5 + $0x5c0] sm:$0xff]
    %v202 = vld [vmem:[#allocation5 + $0x5c8] sm:$0xff]
    %v203 = vld [vmem:[#allocation5 + $0x620] sm:$0xff]
    %v204 = vld [vmem:[#allocation5 + $0x628] sm:$0xff]
    %v205 = vld [vmem:[#allocation5 + $0x630] sm:$0xff]
    %206 = vmatpush.msra.mxu0 %v203
    %207 = vmatpush.msra.mxu0 %v200
    %208 = vmatpush.msra.mxu0 %v197
    %209 = vmatpush.msra.mxu0 %v194
    %210 = vmatpush.msra.mxu0 %v191
    %211 = vmatpush.msra.mxu0 %v188
    %212 = vmatpush.msra.mxu0 %v185
    %213 = vmatpush.msra.mxu0 %v182
    %214 = vmatpush.msra.mxu0 %v179
    %215 = vmatpush.msra.mxu0 %v176
    %216 = vmatpush.msra.mxu0 %v173
    %217 = vmatpush.msra.mxu0 %v170
    %218 = vmatpush.msra.mxu0 %v167
    %219 = vmatpush.msra.mxu0 %v164
    %220 = vmatpush.msra.mxu0 %v161
    %221 = vmatpush.msra.mxu0 %v158
    %222 = vmatmul.f32.gmra.mxu0 %v156
    %v223 = vpop.f32.mrf.mxu0
    %224 = vmatmul.f32.gmra.mxu0 %v157
    %v225 = vpop.f32.mrf.mxu0
    %v226 = vadd.f32 0.0, %v225
    %227 = vdwg.mxu0
    %228 = vmatpush.msra.mxu0 %v204
    %229 = vmatpush.msra.mxu0 %v201
    %230 = vmatpush.msra.mxu0 %v198
    %231 = vmatpush.msra.mxu0 %v195
    %232 = vmatpush.msra.mxu0 %v192
    %233 = vmatpush.msra.mxu0 %v189
    %234 = vmatpush.msra.mxu0 %v186
    %235 = vmatpush.msra.mxu0 %v183
    %236 = vmatpush.msra.mxu0 %v180
    %237 = vmatpush.msra.mxu0 %v177
    %238 = vmatpush.msra.mxu0 %v174
    %239 = vmatpush.msra.mxu0 %v171
    %240 = vmatpush.msra.mxu0 %v168
    %241 = vmatpush.msra.mxu0 %v165
    %242 = vmatpush.msra.mxu0 %v162
    %243 = vmatpush.msra.mxu0 %v159
    %244 = vmatmul.f32.gmra.mxu0 %v156
    %v245 = vpop.f32.mrf.mxu0
    %v246 = vadd.f32 0.0, %v245
    %247 = vmatmul.f32.gmra.mxu0 %v157
    %v248 = vpop.f32.mrf.mxu0
    %249 = vdwg.mxu0
    %250 = vmatpush.msra.mxu0 %v205
    %251 = vmatpush.msra.mxu0 %v202
    %252 = vmatpush.msra.mxu0 %v199
    %253 = vmatpush.msra.mxu0 %v196
    %254 = vmatpush.msra.mxu0 %v193
    %255 = vmatpush.msra.mxu0 %v190
    %256 = vmatpush.msra.mxu0 %v187
    %257 = vmatpush.msra.mxu0 %v184
    %258 = vmatpush.msra.mxu0 %v181
    %259 = vmatpush.msra.mxu0 %v178
    %260 = vmatpush.msra.mxu0 %v175
    %261 = vmatpush.msra.mxu0 %v172
    %262 = vmatpush.msra.mxu0 %v169
    %263 = vmatpush.msra.mxu0 %v166
    %264 = vmatpush.msra.mxu0 %v163
    %265 = vmatpush.msra.mxu0 %v160
    %266 = vmatmul.f32.gmra.mxu0 %v156
    %v267 = vpop.f32.mrf.mxu0
    %v268 = vadd.f32 0.0, %v267
    %269 = vmatmul.f32.gmra.mxu0 %v157
    %v270 = vpop.f32.mrf.mxu0
    %271 = vdwg.mxu0
    %v272 = vld [vmem:[#allocation7 + $0x548] sm:$0x1]
    %v273 = vperm.slane %v272, 0
    %v274 = vadd.f32 %v226, %v273
    %v275 = vld [vmem:[#allocation7 + $0x520] sm:$0xff]
    %v276 = vadd.f32 %v246, %v275
    %v277 = vld [vmem:[#allocation7 + $0x549] sm:$0x1]
    %v278 = vperm.slane %v277, 0
    %v279 = vadd.f32 %v268, %v278
    %v280 = vld [vmem:[#allocation7 + $0x380] sm:$0xff]
    %v281 = vld [vmem:[#allocation7 + $0x388] sm:$0xff]
    %v282 = vld [vmem:[#allocation7 + $0x390] sm:$0xff]
    %v283 = vld [vmem:[#allocation7 + $0x398] sm:$0xff]
    %v284 = vld [vmem:[#allocation7 + $0x3a0] sm:$0xff]
    %v285 = vld [vmem:[#allocation7 + $0x3a8] sm:$0xff]
    %v286 = vld [vmem:[#allocation7 + $0x3b0] sm:$0xff]
    %v287 = vld [vmem:[#allocation7 + $0x3b8] sm:$0xff]
    %v288 = vld [vmem:[#allocation7 + $0x3c0] sm:$0xff]
    %v289 = vld [vmem:[#allocation7 + $0x3c8] sm:$0xff]
    %v290 = vld [vmem:[#allocation7 + $0x3d0] sm:$0xff]
    %v291 = vld [vmem:[#allocation7 + $0x3d8] sm:$0xff]
    %v292 = vld [vmem:[#allocation7 + $0x3e0] sm:$0xff]
    %v293 = vld [vmem:[#allocation7 + $0x3e8] sm:$0xff]
    %v294 = vld [vmem:[#allocation7 + $0x3f0] sm:$0xff]
    %v295 = vld [vmem:[#allocation7 + $0x3f8] sm:$0xff]
    %v296 = vld [vmem:[#allocation7 + $0x400] sm:$0xff]
    %v297 = vld [vmem:[#allocation7 + $0x408] sm:$0xff]
    %v298 = vld [vmem:[#allocation7 + $0x410] sm:$0xff]
    %v299 = vld [vmem:[#allocation7 + $0x418] sm:$0xff]
    %v300 = vld [vmem:[#allocation7 + $0x420] sm:$0xff]
    %v301 = vld [vmem:[#allocation7 + $0x428] sm:$0xff]
    %v302 = vld [vmem:[#allocation7 + $0x430] sm:$0xff]
    %v303 = vld [vmem:[#allocation7 + $0x438] sm:$0xff]
    %v304 = vld [vmem:[#allocation7 + $0x440] sm:$0xff]
    %v305 = vld [vmem:[#allocation7 + $0x448] sm:$0xff]
    %v306 = vld [vmem:[#allocation7 + $0x450] sm:$0xff]
    %v307 = vld [vmem:[#allocation7 + $0x458] sm:$0xff]
    %v308 = vld [vmem:[#allocation7 + $0x460] sm:$0xff]
    %v309 = vld [vmem:[#allocation7 + $0x468] sm:$0xff]
    %v310 = vld [vmem:[#allocation7 + $0x470] sm:$0xff]
    %v311 = vld [vmem:[#allocation7 + $0x478] sm:$0xff]
    %v312 = vld [vmem:[#allocation7 + $0x200] sm:$0xff]
    %v313 = vld [vmem:[#allocation7 + $0x208] sm:$0xff]
    %v314 = vld [vmem:[#allocation7 + $0x210] sm:$0xff]
    %v315 = vld [vmem:[#allocation7 + $0x218] sm:$0xff]
    %v316 = vld [vmem:[#allocation7 + $0x220] sm:$0xff]
    %v317 = vld [vmem:[#allocation7 + $0x228] sm:$0xff]
    %v318 = vld [vmem:[#allocation7 + $0x230] sm:$0xff]
    %v319 = vld [vmem:[#allocation7 + $0x238] sm:$0xff]
    %v320 = vld [vmem:[#allocation7 + $0x240] sm:$0xff]
    %v321 = vld [vmem:[#allocation7 + $0x248] sm:$0xff]
    %v322 = vld [vmem:[#allocation7 + $0x250] sm:$0xff]
    %v323 = vld [vmem:[#allocation7 + $0x258] sm:$0xff]
    %v324 = vld [vmem:[#allocation7 + $0x260] sm:$0xff]
    %v325 = vld [vmem:[#allocation7 + $0x268] sm:$0xff]
    %v326 = vld [vmem:[#allocation7 + $0x270] sm:$0xff]
    %v327 = vld [vmem:[#allocation7 + $0x278] sm:$0xff]
    %v328 = vld [vmem:[#allocation7 + $0x280] sm:$0xff]
    %v329 = vld [vmem:[#allocation7 + $0x288] sm:$0xff]
    %v330 = vld [vmem:[#allocation7 + $0x290] sm:$0xff]
    %v331 = vld [vmem:[#allocation7 + $0x298] sm:$0xff]
    %v332 = vld [vmem:[#allocation7 + $0x2a0] sm:$0xff]
    %v333 = vld [vmem:[#allocation7 + $0x2a8] sm:$0xff]
    %v334 = vld [vmem:[#allocation7 + $0x2b0] sm:$0xff]
    %v335 = vld [vmem:[#allocation7 + $0x2b8] sm:$0xff]
    %v336 = vld [vmem:[#allocation7 + $0x2c0] sm:$0xff]
    %v337 = vld [vmem:[#allocation7 + $0x2c8] sm:$0xff]
    %v338 = vld [vmem:[#allocation7 + $0x2d0] sm:$0xff]
    %v339 = vld [vmem:[#allocation7 + $0x2d8] sm:$0xff]
    %v340 = vld [vmem:[#allocation7 + $0x2e0] sm:$0xff]
    %v341 = vld [vmem:[#allocation7 + $0x2e8] sm:$0xff]
    %v342 = vld [vmem:[#allocation7 + $0x2f0] sm:$0xff]
    %v343 = vld [vmem:[#allocation7 + $0x2f8] sm:$0xff]
    %vm344 = vcmask 64512
    %v346 = vsel %vm344, %v280, 0
    %v349 = vsel %vm344, %v281, 0
    %v352 = vsel %vm344, %v282, 0
    %v355 = vsel %vm344, %v283, 0
    %v358 = vsel %vm344, %v284, 0
    %v361 = vsel %vm344, %v285, 0
    %v364 = vsel %vm344, %v286, 0
    %v367 = vsel %vm344, %v287, 0
    %v370 = vsel %vm344, %v288, 0
    %v373 = vsel %vm344, %v289, 0
    %v376 = vsel %vm344, %v290, 0
    %v379 = vsel %vm344, %v291, 0
    %v382 = vsel %vm344, %v292, 0
    %v385 = vsel %vm344, %v293, 0
    %v388 = vsel %vm344, %v294, 0
    %v391 = vsel %vm344, %v295, 0
    %v394 = vsel %vm344, %v296, 0
    %v397 = vsel %vm344, %v297, 0
    %v400 = vsel %vm344, %v298, 0
    %v403 = vsel %vm344, %v299, 0
    %v406 = vsel %vm344, %v300, 0
    %v409 = vsel %vm344, %v301, 0
    %v412 = vsel %vm344, %v302, 0
    %v415 = vsel %vm344, %v303, 0
    %v418 = vsel %vm344, %v304, 0
    %v421 = vsel %vm344, %v305, 0
    %v424 = vsel %vm344, %v306, 0
    %v427 = vsel %vm344, %v307, 0
    %v430 = vsel %vm344, %v308, 0
    %v433 = vsel %vm344, %v309, 0
    %v436 = vsel %vm344, %v310, 0
    %v439 = vsel %vm344, %v311, 0
    %441 = vmatpush.msra.mxu0 0.0
    %442 = vmatpush.msra.mxu0 0.0
    %443 = vmatpush.msra.mxu0 0.0
    %444 = vmatpush.msra.mxu0 0.0
    %445 = vmatpush.msra.mxu0 0.0
    %446 = vmatpush.msra.mxu0 0.0
    %447 = vmatpush.msra.mxu0 0.0
    %448 = vmatpush.msra.mxu0 0.0
    %449 = vmatpush.msra.mxu0 0.0
    %450 = vmatpush.msra.mxu0 0.0
    %451 = vmatpush.msra.mxu0 0.0
    %452 = vmatpush.msra.mxu0 0.0
    %453 = vmatpush.msra.mxu0 0.0
    %454 = vmatpush.msra.mxu0 0.0
    %455 = vmatpush.msra.mxu0 0.0
    %456 = vmatpush.msra.mxu0 %v276
    %457 = vmatmul.f32.gmra.mxu0 %v346
    %v458 = vpop.f32.mrf.mxu0
    %v459 = vadd.f32 0.0, %v458
    %460 = vmatmul.f32.gmra.mxu0 %v349
    %v461 = vpop.f32.mrf.mxu0
    %v462 = vadd.f32 0.0, %v461
    %463 = vmatmul.f32.gmra.mxu0 %v352
    %v464 = vpop.f32.mrf.mxu0
    %v465 = vadd.f32 0.0, %v464
    %466 = vmatmul.f32.gmra.mxu0 %v355
    %v467 = vpop.f32.mrf.mxu0
    %v468 = vadd.f32 0.0, %v467
    %469 = vmatmul.f32.gmra.mxu0 %v358
    %v470 = vpop.f32.mrf.mxu0
    %v471 = vadd.f32 0.0, %v470
    %472 = vmatmul.f32.gmra.mxu0 %v361
    %v473 = vpop.f32.mrf.mxu0
    %v474 = vadd.f32 0.0, %v473
    %475 = vmatmul.f32.gmra.mxu0 %v364
    %v476 = vpop.f32.mrf.mxu0
    %v477 = vadd.f32 0.0, %v476
    %478 = vmatmul.f32.gmra.mxu0 %v367
    %v479 = vpop.f32.mrf.mxu0
    %v480 = vadd.f32 0.0, %v479
    %481 = vmatmul.f32.gmra.mxu0 %v370
    %v482 = vpop.f32.mrf.mxu0
    %v483 = vadd.f32 0.0, %v482
    %484 = vmatmul.f32.gmra.mxu0 %v373
    %v485 = vpop.f32.mrf.mxu0
    %v486 = vadd.f32 0.0, %v485
    %487 = vmatmul.f32.gmra.mxu0 %v376
    %v488 = vpop.f32.mrf.mxu0
    %v489 = vadd.f32 0.0, %v488
    %490 = vmatmul.f32.gmra.mxu0 %v379
    %v491 = vpop.f32.mrf.mxu0
    %v492 = vadd.f32 0.0, %v491
    %493 = vmatmul.f32.gmra.mxu0 %v382
    %v494 = vpop.f32.mrf.mxu0
    %v495 = vadd.f32 0.0, %v494
    %496 = vmatmul.f32.gmra.mxu0 %v385
    %v497 = vpop.f32.mrf.mxu0
    %v498 = vadd.f32 0.0, %v497
    %499 = vmatmul.f32.gmra.mxu0 %v388
    %v500 = vpop.f32.mrf.mxu0
    %v501 = vadd.f32 0.0, %v500
    %502 = vmatmul.f32.gmra.mxu0 %v391
    %v503 = vpop.f32.mrf.mxu0
    %v504 = vadd.f32 0.0, %v503
    %505 = vmatmul.f32.gmra.mxu0 %v394
    %v506 = vpop.f32.mrf.mxu0
    %v507 = vadd.f32 0.0, %v506
    %508 = vmatmul.f32.gmra.mxu0 %v397
    %v509 = vpop.f32.mrf.mxu0
    %v510 = vadd.f32 0.0, %v509
    %511 = vmatmul.f32.gmra.mxu0 %v400
    %v512 = vpop.f32.mrf.mxu0
    %v513 = vadd.f32 0.0, %v512
    %514 = vmatmul.f32.gmra.mxu0 %v403
    %v515 = vpop.f32.mrf.mxu0
    %v516 = vadd.f32 0.0, %v515
    %517 = vmatmul.f32.gmra.mxu0 %v406
    %v518 = vpop.f32.mrf.mxu0
    %v519 = vadd.f32 0.0, %v518
    %520 = vmatmul.f32.gmra.mxu0 %v409
    %v521 = vpop.f32.mrf.mxu0
    %v522 = vadd.f32 0.0, %v521
    %523 = vmatmul.f32.gmra.mxu0 %v412
    %v524 = vpop.f32.mrf.mxu0
    %v525 = vadd.f32 0.0, %v524
    %526 = vmatmul.f32.gmra.mxu0 %v415
    %v527 = vpop.f32.mrf.mxu0
    %v528 = vadd.f32 0.0, %v527
    %529 = vmatmul.f32.gmra.mxu0 %v418
    %v530 = vpop.f32.mrf.mxu0
    %v531 = vadd.f32 0.0, %v530
    %532 = vmatmul.f32.gmra.mxu0 %v421
    %v533 = vpop.f32.mrf.mxu0
    %v534 = vadd.f32 0.0, %v533
    %535 = vmatmul.f32.gmra.mxu0 %v424
    %v536 = vpop.f32.mrf.mxu0
    %v537 = vadd.f32 0.0, %v536
    %538 = vmatmul.f32.gmra.mxu0 %v427
    %v539 = vpop.f32.mrf.mxu0
    %v540 = vadd.f32 0.0, %v539
    %541 = vmatmul.f32.gmra.mxu0 %v430
    %v542 = vpop.f32.mrf.mxu0
    %v543 = vadd.f32 0.0, %v542
    %544 = vmatmul.f32.gmra.mxu0 %v433
    %v545 = vpop.f32.mrf.mxu0
    %v546 = vadd.f32 0.0, %v545
    %547 = vmatmul.f32.gmra.mxu0 %v436
    %v548 = vpop.f32.mrf.mxu0
    %v549 = vadd.f32 0.0, %v548
    %550 = vmatmul.f32.gmra.mxu0 %v439
    %v551 = vpop.f32.mrf.mxu0
    %v552 = vadd.f32 0.0, %v551
    %553 = vdwg.mxu0
    %v554 = vmul.f32 %v459, %v312
    %v555 = vmul.f32 %v462, %v313
    %v556 = vmul.f32 %v465, %v314
    %v557 = vmul.f32 %v468, %v315
    %v558 = vmul.f32 %v471, %v316
    %v559 = vmul.f32 %v474, %v317
    %v560 = vmul.f32 %v477, %v318
    %v561 = vmul.f32 %v480, %v319
    %v562 = vmul.f32 %v483, %v320
    %v563 = vmul.f32 %v486, %v321
    %v564 = vmul.f32 %v489, %v322
    %v565 = vmul.f32 %v492, %v323
    %v566 = vmul.f32 %v495, %v324
    %v567 = vmul.f32 %v498, %v325
    %v568 = vmul.f32 %v501, %v326
    %v569 = vmul.f32 %v504, %v327
    %v570 = vmul.f32 %v507, %v328
    %v571 = vmul.f32 %v510, %v329
    %v572 = vmul.f32 %v513, %v330
    %v573 = vmul.f32 %v516, %v331
    %v574 = vmul.f32 %v519, %v332
    %v575 = vmul.f32 %v522, %v333
    %v576 = vmul.f32 %v525, %v334
    %v577 = vmul.f32 %v528, %v335
    %v578 = vmul.f32 %v531, %v336
    %v579 = vmul.f32 %v534, %v337
    %v580 = vmul.f32 %v537, %v338
    %v581 = vmul.f32 %v540, %v339
    %v582 = vmul.f32 %v543, %v340
    %v583 = vmul.f32 %v546, %v341
    %v584 = vmul.f32 %v549, %v342
    %v585 = vmul.f32 %v552, %v343
    %586 = vmatpush.msra.mxu0 0.0
    %587 = vmatpush.msra.mxu0 0.0
    %588 = vmatpush.msra.mxu0 0.0
    %589 = vmatpush.msra.mxu0 0.0
    %590 = vmatpush.msra.mxu0 0.0
    %591 = vmatpush.msra.mxu0 0.0
    %592 = vmatpush.msra.mxu0 0.0
    %593 = vmatpush.msra.mxu0 0.0
    %594 = vmatpush.msra.mxu0 0.0
    %595 = vmatpush.msra.mxu0 0.0
    %596 = vmatpush.msra.mxu0 0.0
    %597 = vmatpush.msra.mxu0 0.0
    %598 = vmatpush.msra.mxu0 0.0
    %599 = vmatpush.msra.mxu0 0.0
    %600 = vmatpush.msra.mxu0 0.0
    %601 = vmatpush.msra.mxu0 %v279
    %602 = vmatmul.f32.gmra.mxu0 %v346
    %v603 = vpop.f32.mrf.mxu0
    %v604 = vadd.f32 0.0, %v603
    %605 = vmatmul.f32.gmra.mxu0 %v349
    %v606 = vpop.f32.mrf.mxu0
    %v607 = vadd.f32 0.0, %v606
    %608 = vmatmul.f32.gmra.mxu0 %v352
    %v609 = vpop.f32.mrf.mxu0
    %v610 = vadd.f32 0.0, %v609
    %611 = vmatmul.f32.gmra.mxu0 %v355
    %v612 = vpop.f32.mrf.mxu0
    %v613 = vadd.f32 0.0, %v612
    %614 = vmatmul.f32.gmra.mxu0 %v358
    %v615 = vpop.f32.mrf.mxu0
    %v616 = vadd.f32 0.0, %v615
    %617 = vmatmul.f32.gmra.mxu0 %v361
    %v618 = vpop.f32.mrf.mxu0
    %v619 = vadd.f32 0.0, %v618
    %620 = vmatmul.f32.gmra.mxu0 %v364
    %v621 = vpop.f32.mrf.mxu0
    %v622 = vadd.f32 0.0, %v621
    %623 = vmatmul.f32.gmra.mxu0 %v367
    %v624 = vpop.f32.mrf.mxu0
    %v625 = vadd.f32 0.0, %v624
    %626 = vmatmul.f32.gmra.mxu0 %v370
    %v627 = vpop.f32.mrf.mxu0
    %v628 = vadd.f32 0.0, %v627
    %629 = vmatmul.f32.gmra.mxu0 %v373
    %v630 = vpop.f32.mrf.mxu0
    %v631 = vadd.f32 0.0, %v630
    %632 = vmatmul.f32.gmra.mxu0 %v376
    %v633 = vpop.f32.mrf.mxu0
    %v634 = vadd.f32 0.0, %v633
    %635 = vmatmul.f32.gmra.mxu0 %v379
    %v636 = vpop.f32.mrf.mxu0
    %v637 = vadd.f32 0.0, %v636
    %638 = vmatmul.f32.gmra.mxu0 %v382
    %v639 = vpop.f32.mrf.mxu0
    %v640 = vadd.f32 0.0, %v639
    %641 = vmatmul.f32.gmra.mxu0 %v385
    %v642 = vpop.f32.mrf.mxu0
    %v643 = vadd.f32 0.0, %v642
    %644 = vmatmul.f32.gmra.mxu0 %v388
    %v645 = vpop.f32.mrf.mxu0
    %v646 = vadd.f32 0.0, %v645
    %647 = vmatmul.f32.gmra.mxu0 %v391
    %v648 = vpop.f32.mrf.mxu0
    %v649 = vadd.f32 0.0, %v648
    %650 = vmatmul.f32.gmra.mxu0 %v394
    %v651 = vpop.f32.mrf.mxu0
    %v652 = vadd.f32 0.0, %v651
    %653 = vmatmul.f32.gmra.mxu0 %v397
    %v654 = vpop.f32.mrf.mxu0
    %v655 = vadd.f32 0.0, %v654
    %656 = vmatmul.f32.gmra.mxu0 %v400
    %v657 = vpop.f32.mrf.mxu0
    %v658 = vadd.f32 0.0, %v657
    %659 = vmatmul.f32.gmra.mxu0 %v403
    %v660 = vpop.f32.mrf.mxu0
    %v661 = vadd.f32 0.0, %v660
    %662 = vmatmul.f32.gmra.mxu0 %v406
    %v663 = vpop.f32.mrf.mxu0
    %v664 = vadd.f32 0.0, %v663
    %665 = vmatmul.f32.gmra.mxu0 %v409
    %v666 = vpop.f32.mrf.mxu0
    %v667 = vadd.f32 0.0, %v666
    %668 = vmatmul.f32.gmra.mxu0 %v412
    %v669 = vpop.f32.mrf.mxu0
    %v670 = vadd.f32 0.0, %v669
    %671 = vmatmul.f32.gmra.mxu0 %v415
    %v672 = vpop.f32.mrf.mxu0
    %v673 = vadd.f32 0.0, %v672
    %674 = vmatmul.f32.gmra.mxu0 %v418
    %v675 = vpop.f32.mrf.mxu0
    %v676 = vadd.f32 0.0, %v675
    %677 = vmatmul.f32.gmra.mxu0 %v421
    %v678 = vpop.f32.mrf.mxu0
    %v679 = vadd.f32 0.0, %v678
    %680 = vmatmul.f32.gmra.mxu0 %v424
    %v681 = vpop.f32.mrf.mxu0
    %v682 = vadd.f32 0.0, %v681
    %683 = vmatmul.f32.gmra.mxu0 %v427
    %v684 = vpop.f32.mrf.mxu0
    %v685 = vadd.f32 0.0, %v684
    %686 = vmatmul.f32.gmra.mxu0 %v430
    %v687 = vpop.f32.mrf.mxu0
    %v688 = vadd.f32 0.0, %v687
    %689 = vmatmul.f32.gmra.mxu0 %v433
    %v690 = vpop.f32.mrf.mxu0
    %v691 = vadd.f32 0.0, %v690
    %692 = vmatmul.f32.gmra.mxu0 %v436
    %v693 = vpop.f32.mrf.mxu0
    %v694 = vadd.f32 0.0, %v693
    %695 = vmatmul.f32.gmra.mxu0 %v439
    %v696 = vpop.f32.mrf.mxu0
    %v697 = vadd.f32 0.0, %v696
    %698 = vdwg.mxu0
    %v699 = vmul.f32 %v604, %v312
    %v700 = vmul.f32 %v607, %v313
    %v701 = vmul.f32 %v610, %v314
    %v702 = vmul.f32 %v613, %v315
    %v703 = vmul.f32 %v616, %v316
    %v704 = vmul.f32 %v619, %v317
    %v705 = vmul.f32 %v622, %v318
    %v706 = vmul.f32 %v625, %v319
    %v707 = vmul.f32 %v628, %v320
    %v708 = vmul.f32 %v631, %v321
    %v709 = vmul.f32 %v634, %v322
    %v710 = vmul.f32 %v637, %v323
    %v711 = vmul.f32 %v640, %v324
    %v712 = vmul.f32 %v643, %v325
    %v713 = vmul.f32 %v646, %v326
    %v714 = vmul.f32 %v649, %v327
    %v715 = vmul.f32 %v652, %v328
    %v716 = vmul.f32 %v655, %v329
    %v717 = vmul.f32 %v658, %v330
    %v718 = vmul.f32 %v661, %v331
    %v719 = vmul.f32 %v664, %v332
    %v720 = vmul.f32 %v667, %v333
    %v721 = vmul.f32 %v670, %v334
    %v722 = vmul.f32 %v673, %v335
    %v723 = vmul.f32 %v676, %v336
    %v724 = vmul.f32 %v679, %v337
    %v725 = vmul.f32 %v682, %v338
    %v726 = vmul.f32 %v685, %v339
    %v727 = vmul.f32 %v688, %v340
    %v728 = vmul.f32 %v691, %v341
    %v729 = vmul.f32 %v694, %v342
    %v730 = vmul.f32 %v697, %v343
    %731 = vmatpush.xpose.msra.mxu0 %v569
    %732 = vmatpush.xpose.msra.mxu0 %v568
    %733 = vmatpush.xpose.msra.mxu0 %v567
    %734 = vmatpush.xpose.msra.mxu0 %v566
    %735 = vmatpush.xpose.msra.mxu0 %v565
    %736 = vmatpush.xpose.msra.mxu0 %v564
    %737 = vmatpush.xpose.msra.mxu0 %v563
    %738 = vmatpush.xpose.msra.mxu0 %v562
    %739 = vmatpush.xpose.msra.mxu0 %v561
    %740 = vmatpush.xpose.msra.mxu0 %v560
    %741 = vmatpush.xpose.msra.mxu0 %v559
    %742 = vmatpush.xpose.msra.mxu0 %v558
    %743 = vmatpush.xpose.msra.mxu0 %v557
    %744 = vmatpush.xpose.msra.mxu0 %v556
    %745 = vmatpush.xpose.msra.mxu0 %v555
    %746 = vmatpush.xpose.msra.mxu0 %v554
    %747 = vmatmul.f32.gmra.mxu0 %v274
    %v748 = vpop.f32.mrf.mxu0
    %v749 = vadd.f32 0.0, %v748
    %750 = vdwg.mxu0
    %751 = vmatpush.xpose.msra.mxu0 %v585
    %752 = vmatpush.xpose.msra.mxu0 %v584
    %753 = vmatpush.xpose.msra.mxu0 %v583
    %754 = vmatpush.xpose.msra.mxu0 %v582
    %755 = vmatpush.xpose.msra.mxu0 %v581
    %756 = vmatpush.xpose.msra.mxu0 %v580
    %757 = vmatpush.xpose.msra.mxu0 %v579
    %758 = vmatpush.xpose.msra.mxu0 %v578
    %759 = vmatpush.xpose.msra.mxu0 %v577
    %760 = vmatpush.xpose.msra.mxu0 %v576
    %761 = vmatpush.xpose.msra.mxu0 %v575
    %762 = vmatpush.xpose.msra.mxu0 %v574
    %763 = vmatpush.xpose.msra.mxu0 %v573
    %764 = vmatpush.xpose.msra.mxu0 %v572
    %765 = vmatpush.xpose.msra.mxu0 %v571
    %766 = vmatpush.xpose.msra.mxu0 %v570
    %767 = vmatmul.f32.gmra.mxu0 %v274
    %v768 = vpop.f32.mrf.mxu0
    %v769 = vadd.f32 0.0, %v768
    %770 = vdwg.mxu0
    %v771 = vmul.f32 %v749, 0.5
    %v772 = vmul.f32 %v769, 0.5
    %vm773 = vcmask 1043456
    %v774 = vsel %vm773, %v771, -inf
    %v775 = vsel %vm773, %v772, -inf
    %v776 = vmax.f32 %v774, %v775
    %777 = vmax.xlane.f32.xlu0 %v776
    %v778 = vpop.xlane.xlu0 %777
    %v779 = vsub.f32 %v771, %v778
    %v780 = vsub.f32 %v772, %v778
    %v781 = vmul.f32 %v779, 1.442695
    %v782 = vpow.pop %v781
    %v783 = vmul.f32 %v780, 1.442695
    %v784 = vpow.pop %v783
    %785 = vmatpush.msra.mxu0 %v714
    %786 = vmatpush.msra.mxu0 %v713
    %787 = vmatpush.msra.mxu0 %v712
    %788 = vmatpush.msra.mxu0 %v711
    %789 = vmatpush.msra.mxu0 %v710
    %790 = vmatpush.msra.mxu0 %v709
    %791 = vmatpush.msra.mxu0 %v708
    %792 = vmatpush.msra.mxu0 %v707
    %793 = vmatpush.msra.mxu0 %v706
    %794 = vmatpush.msra.mxu0 %v705
    %795 = vmatpush.msra.mxu0 %v704
    %796 = vmatpush.msra.mxu0 %v703
    %797 = vmatpush.msra.mxu0 %v702
    %798 = vmatpush.msra.mxu0 %v701
    %799 = vmatpush.msra.mxu0 %v700
    %800 = vmatpush.msra.mxu0 %v699
    %801 = vmatmul.f32.gmra.mxu0 %v782
    %v802 = vpop.f32.mrf.mxu0
    %v803 = vadd.f32 0.0, %v802
    %804 = vdwg.mxu0
    %805 = vmatpush.msra.mxu0 %v730
    %806 = vmatpush.msra.mxu0 %v729
    %807 = vmatpush.msra.mxu0 %v728
    %808 = vmatpush.msra.mxu0 %v727
    %809 = vmatpush.msra.mxu0 %v726
    %810 = vmatpush.msra.mxu0 %v725
    %811 = vmatpush.msra.mxu0 %v724
    %812 = vmatpush.msra.mxu0 %v723
    %813 = vmatpush.msra.mxu0 %v722
    %814 = vmatpush.msra.mxu0 %v721
    %815 = vmatpush.msra.mxu0 %v720
    %816 = vmatpush.msra.mxu0 %v719
    %817 = vmatpush.msra.mxu0 %v718
    %818 = vmatpush.msra.mxu0 %v717
    %819 = vmatpush.msra.mxu0 %v716
    %820 = vmatpush.msra.mxu0 %v715
    %821 = vmatmul.f32.gmra.mxu0 %v784
    %v822 = vpop.f32.mrf.mxu0
    %v823 = vadd.f32 %v803, %v822
    %824 = vdwg.mxu0
    %825 = vmatpush.msra.mxu0 %v327
    %826 = vmatpush.msra.mxu0 %v326
    %827 = vmatpush.msra.mxu0 %v325
    %828 = vmatpush.msra.mxu0 %v324
    %829 = vmatpush.msra.mxu0 %v323
    %830 = vmatpush.msra.mxu0 %v322
    %831 = vmatpush.msra.mxu0 %v321
    %832 = vmatpush.msra.mxu0 %v320
    %833 = vmatpush.msra.mxu0 %v319
    %834 = vmatpush.msra.mxu0 %v318
    %835 = vmatpush.msra.mxu0 %v317
    %836 = vmatpush.msra.mxu0 %v316
    %837 = vmatpush.msra.mxu0 %v315
    %838 = vmatpush.msra.mxu0 %v314
    %839 = vmatpush.msra.mxu0 %v313
    %840 = vmatpush.msra.mxu0 %v312
    %841 = vmatmul.f32.gmra.mxu0 %v782
    %v842 = vpop.f32.mrf.mxu0
    %v843 = vadd.f32 0.0, %v842
    %844 = vdwg.mxu0
    %845 = vmatpush.msra.mxu0 %v343
    %846 = vmatpush.msra.mxu0 %v342
    %847 = vmatpush.msra.mxu0 %v341
    %848 = vmatpush.msra.mxu0 %v340
    %849 = vmatpush.msra.mxu0 %v339
    %850 = vmatpush.msra.mxu0 %v338
    %851 = vmatpush.msra.mxu0 %v337
    %852 = vmatpush.msra.mxu0 %v336
    %853 = vmatpush.msra.mxu0 %v335
    %854 = vmatpush.msra.mxu0 %v334
    %855 = vmatpush.msra.mxu0 %v333
    %856 = vmatpush.msra.mxu0 %v332
    %857 = vmatpush.msra.mxu0 %v331
    %858 = vmatpush.msra.mxu0 %v330
    %859 = vmatpush.msra.mxu0 %v329
    %860 = vmatpush.msra.mxu0 %v328
    %861 = vmatmul.f32.gmra.mxu0 %v784
    %v862 = vpop.f32.mrf.mxu0
    %v863 = vadd.f32 %v843, %v862
    %864 = vdwg.mxu0
    %v865 = vrcp.pop %v863
    %v866 = vmul.f32 %v863, %v865
    %v867 = vsub.f32 1.0, %v866
    %v868 = vmul.f32 %v865, %v867
    %v869 = vadd.f32 %v865, %v868
    %vm870 = vweird.f32 %v863
    %vm871 = vweird.f32 %v865
    %vm872 = vmor %vm870, %vm871
    %v873 = vsel %vm872, %v865, %v869
    %v874 = vand.u32 2147483647, %v863
    %vm875 = vcmp.eq.f32.partialorder %v874, 8.507059e+37
    %v876 = vand.u32 %v863, 2147483648
    %v877 = vor.u32 1.1754944e-38, %v876
    %v878 = vsel %vm875, %v877, %v873
    %v879 = vmul.f32 %v823, %v878
    %v880 = vld [vmem:[#allocation5 + $0x58] sm:$0xff]
    %v881 = vld [vmem:[#allocation5 + $0xc0] sm:$0xff]
    %v882 = vld [vmem:[#allocation5 + $0x128] sm:$0xff]
    %v883 = vld [vmem:[#allocation5 + $0x190] sm:$0xff]
    %v884 = vld [vmem:[#allocation5 + $0x1f8] sm:$0xff]
    %v885 = vld [vmem:[#allocation5 + $0x260] sm:$0xff]
    %v886 = vld [vmem:[#allocation5 + $0x2c8] sm:$0xff]
    %v887 = vld [vmem:[#allocation5 + $0x330] sm:$0xff]
    %v888 = vld [vmem:[#allocation5 + $0x398] sm:$0xff]
    %v889 = vld [vmem:[#allocation5 + $0x400] sm:$0xff]
    %v890 = vld [vmem:[#allocation5 + $0x468] sm:$0xff]
    %v891 = vld [vmem:[#allocation5 + $0x4d0] sm:$0xff]
    %v892 = vld [vmem:[#allocation5 + $0x538] sm:$0xff]
    %v893 = vld [vmem:[#allocation5 + $0x5a0] sm:$0xff]
    %v894 = vld [vmem:[#allocation5 + $0x608] sm:$0xff]
    %v895 = vld [vmem:[#allocation5 + $0x670] sm:$0xff]
    %v896 = vld [vmem:[#allocation7 + $0x538] sm:$0xf]
    %897 = vmatpush.msra.mxu0 %v895
    %898 = vmatpush.msra.mxu0 %v894
    %899 = vmatpush.msra.mxu0 %v893
    %900 = vmatpush.msra.mxu0 %v892
    %901 = vmatpush.msra.mxu0 %v891
    %902 = vmatpush.msra.mxu0 %v890
    %903 = vmatpush.msra.mxu0 %v889
    %904 = vmatpush.msra.mxu0 %v888
    %905 = vmatpush.msra.mxu0 %v887
    %906 = vmatpush.msra.mxu0 %v886
    %907 = vmatpush.msra.mxu0 %v885
    %908 = vmatpush.msra.mxu0 %v884
    %909 = vmatpush.msra.mxu0 %v883
    %910 = vmatpush.msra.mxu0 %v882
    %911 = vmatpush.msra.mxu0 %v881
    %912 = vmatpush.msra.mxu0 %v880
    %913 = vmatmul.f32.gmra.mxu0 %v879
    %v914 = vpop.f32.mrf.mxu0
    %v915 = vadd.f32 %v896, %v914
    %916 = vdwg.mxu0
    %v917 = vld [vmem:[#allocation7 + $0x54e] sm:$0x1]
    %v918 = vld [vmem:[#allocation7 + $0x54f] sm:$0x1]
    %919 = vmatpush.msra.mxu0 %v75
    %920 = vmatpush.msra.mxu0 %v74
    %921 = vmatpush.msra.mxu0 %v73
    %922 = vmatpush.msra.mxu0 %v72
    %923 = vmatpush.msra.mxu0 %v71
    %924 = vmatpush.msra.mxu0 %v70
    %925 = vmatpush.msra.mxu0 %v69
    %926 = vmatpush.msra.mxu0 %v68
    %927 = vmatpush.msra.mxu0 %v67
    %928 = vmatpush.msra.mxu0 %v66
    %929 = vmatpush.msra.mxu0 %v65
    %930 = vmatpush.msra.mxu0 %v64
    %931 = vmatpush.msra.mxu0 %v63
    %932 = vmatpush.msra.mxu0 %v62
    %933 = vmatpush.msra.mxu0 %v61
    %934 = vmatpush.msra.mxu0 %v60
    %935 = vmatmul.f32.gmra.mxu0 %v915
    %v936 = vpop.f32.mrf.mxu0
    %v937 = vadd.f32 0.0, %v936
    %938 = vdwg.mxu0
    %v939 = vsub.f32 %v915, %v937
    %v940 = vmul.f32 %v939, %v939
    %941 = vmatpush.msra.mxu0 %v75
    %942 = vmatpush.msra.mxu0 %v74
    %943 = vmatpush.msra.mxu0 %v73
    %944 = vmatpush.msra.mxu0 %v72
    %945 = vmatpush.msra.mxu0 %v71
    %946 = vmatpush.msra.mxu0 %v70
    %947 = vmatpush.msra.mxu0 %v69
    %948 = vmatpush.msra.mxu0 %v68
    %949 = vmatpush.msra.mxu0 %v67
    %950 = vmatpush.msra.mxu0 %v66
    %951 = vmatpush.msra.mxu0 %v65
    %952 = vmatpush.msra.mxu0 %v64
    %953 = vmatpush.msra.mxu0 %v63
    %954 = vmatpush.msra.mxu0 %v62
    %955 = vmatpush.msra.mxu0 %v61
    %956 = vmatpush.msra.mxu0 %v60
    %957 = vmatmul.f32.gmra.mxu0 %v940
    %v958 = vpop.f32.mrf.mxu0
    %v959 = vadd.f32 1e-05, %v958
    %960 = vdwg.mxu0
    %v961 = vrsqrt.pop %v959
    %v962 = vmul.f32 %v961, %v959
    %v963 = vmul.f32 %v962, %v961
    %v964 = vmul.f32 0.5, %v963
    %v965 = vsub.f32 1.5, %v964
    %v966 = vmul.f32 %v961, %v965
    %vm967 = vweird.f32 %v959
    %vm968 = vweird.f32 %v961
    %vm969 = vmor %vm967, %vm968
    %v970 = vsel %vm969, %v961, %v966
    %v971 = vmul.f32 %v939, %v970
    %v972 = vperm.slane %v917, 0
    %v973 = vmul.f32 %v971, %v972
    %v974 = vperm.slane %v918, 0
    %v975 = vadd.f32 %v973, %v974
    %v976 = vld [vmem:[#allocation5 + $0x20] sm:$0xff]
    %v977 = vld [vmem:[#allocation5 + $0x28] sm:$0xff]
    %v978 = vld [vmem:[#allocation5 + $0x30] sm:$0xff]
    %v979 = vld [vmem:[#allocation5 + $0x88] sm:$0xff]
    %v980 = vld [vmem:[#allocation5 + $0x90] sm:$0xff]
    %v981 = vld [vmem:[#allocation5 + $0x98] sm:$0xff]
    %v982 = vld [vmem:[#allocation5 + $0xf0] sm:$0xff]
    %v983 = vld [vmem:[#allocation5 + $0xf8] sm:$0xff]
    %v984 = vld [vmem:[#allocation5 + $0x100] sm:$0xff]
    %v985 = vld [vmem:[#allocation5 + $0x158] sm:$0xff]
    %v986 = vld [vmem:[#allocation5 + $0x160] sm:$0xff]
    %v987 = vld [vmem:[#allocation5 + $0x168] sm:$0xff]
    %v988 = vld [vmem:[#allocation5 + $0x1c0] sm:$0xff]
    %v989 = vld [vmem:[#allocation5 + $0x1c8] sm:$0xff]
    %v990 = vld [vmem:[#allocation5 + $0x1d0] sm:$0xff]
    %v991 = vld [vmem:[#allocation5 + $0x228] sm:$0xff]
    %v992 = vld [vmem:[#allocation5 + $0x230] sm:$0xff]
    %v993 = vld [vmem:[#allocation5 + $0x238] sm:$0xff]
    %v994 = vld [vmem:[#allocation5 + $0x290] sm:$0xff]
    %v995 = vld [vmem:[#allocation5 + $0x298] sm:$0xff]
    %v996 = vld [vmem:[#allocation5 + $0x2a0] sm:$0xff]
    %v997 = vld [vmem:[#allocation5 + $0x2f8] sm:$0xff]
    %v998 = vld [vmem:[#allocation5 + $0x300] sm:$0xff]
    %v999 = vld [vmem:[#allocation5 + $0x308] sm:$0xff]
    %v1000 = vld [vmem:[#allocation5 + $0x360] sm:$0xff]
    %v1001 = vld [vmem:[#allocation5 + $0x368] sm:$0xff]
    %v1002 = vld [vmem:[#allocation5 + $0x370] sm:$0xff]
    %v1003 = vld [vmem:[#allocation5 + $0x3c8] sm:$0xff]
    %v1004 = vld [vmem:[#allocation5 + $0x3d0] sm:$0xff]
    %v1005 = vld [vmem:[#allocation5 + $0x3d8] sm:$0xff]
    %v1006 = vld [vmem:[#allocation5 + $0x430] sm:$0xff]
    %v1007 = vld [vmem:[#allocation5 + $0x438] sm:$0xff]
    %v1008 = vld [vmem:[#allocation5 + $0x440] sm:$0xff]
    %v1009 = vld [vmem:[#allocation5 + $0x498] sm:$0xff]
    %v1010 = vld [vmem:[#allocation5 + $0x4a0] sm:$0xff]
    %v1011 = vld [vmem:[#allocation5 + $0x4a8] sm:$0xff]
    %v1012 = vld [vmem:[#allocation5 + $0x500] sm:$0xff]
    %v1013 = vld [vmem:[#allocation5 + $0x508] sm:$0xff]
    %v1014 = vld [vmem:[#allocation5 + $0x510] sm:$0xff]
    %v1015 = vld [vmem:[#allocation5 + $0x568] sm:$0xff]
    %v1016 = vld [vmem:[#allocation5 + $0x570] sm:$0xff]
    %v1017 = vld [vmem:[#allocation5 + $0x578] sm:$0xff]
    %v1018 = vld [vmem:[#allocation5 + $0x5d0] sm:$0xff]
    %v1019 = vld [vmem:[#allocation5 + $0x5d8] sm:$0xff]
    %v1020 = vld [vmem:[#allocation5 + $0x5e0] sm:$0xff]
    %v1021 = vld [vmem:[#allocation5 + $0x638] sm:$0xff]
    %v1022 = vld [vmem:[#allocation5 + $0x640] sm:$0xff]
    %v1023 = vld [vmem:[#allocation5 + $0x648] sm:$0xff]
    %1024 = vmatpush.msra.mxu0 %v1021
    %1025 = vmatpush.msra.mxu0 %v1018
    %1026 = vmatpush.msra.mxu0 %v1015
    %1027 = vmatpush.msra.mxu0 %v1012
    %1028 = vmatpush.msra.mxu0 %v1009
    %1029 = vmatpush.msra.mxu0 %v1006
    %1030 = vmatpush.msra.mxu0 %v1003
    %1031 = vmatpush.msra.mxu0 %v1000
    %1032 = vmatpush.msra.mxu0 %v997
    %1033 = vmatpush.msra.mxu0 %v994
    %1034 = vmatpush.msra.mxu0 %v991
    %1035 = vmatpush.msra.mxu0 %v988
    %1036 = vmatpush.msra.mxu0 %v985
    %1037 = vmatpush.msra.mxu0 %v982
    %1038 = vmatpush.msra.mxu0 %v979
    %1039 = vmatpush.msra.mxu0 %v976
    %1040 = vmatmul.f32.gmra.mxu0 %v156
    %v1041 = vpop.f32.mrf.mxu0
    %v1042 = vadd.f32 0.0, %v1041
    %1043 = vmatmul.f32.gmra.mxu0 %v975
    %v1044 = vpop.f32.mrf.mxu0
    %1045 = vdwg.mxu0
    %1046 = vmatpush.msra.mxu0 %v1022
    %1047 = vmatpush.msra.mxu0 %v1019
    %1048 = vmatpush.msra.mxu0 %v1016
    %1049 = vmatpush.msra.mxu0 %v1013
    %1050 = vmatpush.msra.mxu0 %v1010
    %1051 = vmatpush.msra.mxu0 %v1007
    %1052 = vmatpush.msra.mxu0 %v1004
    %1053 = vmatpush.msra.mxu0 %v1001
    %1054 = vmatpush.msra.mxu0 %v998
    %1055 = vmatpush.msra.mxu0 %v995
    %1056 = vmatpush.msra.mxu0 %v992
    %1057 = vmatpush.msra.mxu0 %v989
    %1058 = vmatpush.msra.mxu0 %v986
    %1059 = vmatpush.msra.mxu0 %v983
    %1060 = vmatpush.msra.mxu0 %v980
    %1061 = vmatpush.msra.mxu0 %v977
    %1062 = vmatmul.f32.gmra.mxu0 %v156
    %v1063 = vpop.f32.mrf.mxu0
    %1064 = vmatmul.f32.gmra.mxu0 %v975
    %v1065 = vpop.f32.mrf.mxu0
    %v1066 = vadd.f32 0.0, %v1065
    %1067 = vdwg.mxu0
    %1068 = vmatpush.msra.mxu0 %v1023
    %1069 = vmatpush.msra.mxu0 %v1020
    %1070 = vmatpush.msra.mxu0 %v1017
    %1071 = vmatpush.msra.mxu0 %v1014
    %1072 = vmatpush.msra.mxu0 %v1011
    %1073 = vmatpush.msra.mxu0 %v1008
    %1074 = vmatpush.msra.mxu0 %v1005
    %1075 = vmatpush.msra.mxu0 %v1002
    %1076 = vmatpush.msra.mxu0 %v999
    %1077 = vmatpush.msra.mxu0 %v996
    %1078 = vmatpush.msra.mxu0 %v993
    %1079 = vmatpush.msra.mxu0 %v990
    %1080 = vmatpush.msra.mxu0 %v987
    %1081 = vmatpush.msra.mxu0 %v984
    %1082 = vmatpush.msra.mxu0 %v981
    %1083 = vmatpush.msra.mxu0 %v978
    %1084 = vmatmul.f32.gmra.mxu0 %v156
    %v1085 = vpop.f32.mrf.mxu0
    %1086 = vmatmul.f32.gmra.mxu0 %v975
    %v1087 = vpop.f32.mrf.mxu0
    %v1088 = vadd.f32 0.0, %v1087
    %1089 = vdwg.mxu0
    %v1090 = vld [vmem:[#allocation7 + $0x528] sm:$0xff]
    %v1091 = vadd.f32 %v1042, %v1090
    %v1092 = vld [vmem:[#allocation7 + $0x54a] sm:$0x1]
    %v1093 = vperm.slane %v1092, 0
    %v1094 = vadd.f32 %v1066, %v1093
    %v1095 = vld [vmem:[#allocation7 + $0x54b] sm:$0x1]
    %v1096 = vperm.slane %v1095, 0
    %v1097 = vadd.f32 %v1088, %v1096
    %v1098 = vld [vmem:[#allocation7 + $0x480] sm:$0xff]
    %v1099 = vld [vmem:[#allocation7 + $0x488] sm:$0xff]
    %v1100 = vld [vmem:[#allocation7 + $0x490] sm:$0xff]
    %v1101 = vld [vmem:[#allocation7 + $0x498] sm:$0xff]
    %v1102 = vld [vmem:[#allocation7 + $0x4a0] sm:$0xff]
    %v1103 = vld [vmem:[#allocation7 + $0x4a8] sm:$0xff]
    %v1104 = vld [vmem:[#allocation7 + $0x4b0] sm:$0xff]
    %v1105 = vld [vmem:[#allocation7 + $0x4b8] sm:$0xff]
    %v1106 = vld [vmem:[#allocation7 + $0x4c0] sm:$0xff]
    %v1107 = vld [vmem:[#allocation7 + $0x4c8] sm:$0xff]
    %v1108 = vld [vmem:[#allocation7 + $0x4d0] sm:$0xff]
    %v1109 = vld [vmem:[#allocation7 + $0x4d8] sm:$0xff]
    %v1110 = vld [vmem:[#allocation7 + $0x4e0] sm:$0xff]
    %v1111 = vld [vmem:[#allocation7 + $0x4e8] sm:$0xff]
    %v1112 = vld [vmem:[#allocation7 + $0x4f0] sm:$0xff]
    %v1113 = vld [vmem:[#allocation7 + $0x4f8] sm:$0xff]
    %v1114 = vld [vmem:[#allocation7 + $0x300] sm:$0xff]
    %v1115 = vld [vmem:[#allocation7 + $0x308] sm:$0xff]
    %v1116 = vld [vmem:[#allocation7 + $0x310] sm:$0xff]
    %v1117 = vld [vmem:[#allocation7 + $0x318] sm:$0xff]
    %v1118 = vld [vmem:[#allocation7 + $0x320] sm:$0xff]
    %v1119 = vld [vmem:[#allocation7 + $0x328] sm:$0xff]
    %v1120 = vld [vmem:[#allocation7 + $0x330] sm:$0xff]
    %v1121 = vld [vmem:[#allocation7 + $0x338] sm:$0xff]
    %v1122 = vld [vmem:[#allocation7 + $0x340] sm:$0xff]
    %v1123 = vld [vmem:[#allocation7 + $0x348] sm:$0xff]
    %v1124 = vld [vmem:[#allocation7 + $0x350] sm:$0xff]
    %v1125 = vld [vmem:[#allocation7 + $0x358] sm:$0xff]
    %v1126 = vld [vmem:[#allocation7 + $0x360] sm:$0xff]
    %v1127 = vld [vmem:[#allocation7 + $0x368] sm:$0xff]
    %v1128 = vld [vmem:[#allocation7 + $0x370] sm:$0xff]
    %v1129 = vld [vmem:[#allocation7 + $0x378] sm:$0xff]
    %vm1130 = vcmask 31744
    %v1132 = vsel %vm1130, %v1098, 0
    %v1135 = vsel %vm1130, %v1099, 0
    %v1138 = vsel %vm1130, %v1100, 0
    %v1141 = vsel %vm1130, %v1101, 0
    %v1144 = vsel %vm1130, %v1102, 0
    %v1147 = vsel %vm1130, %v1103, 0
    %v1150 = vsel %vm1130, %v1104, 0
    %v1153 = vsel %vm1130, %v1105, 0
    %v1156 = vsel %vm1130, %v1106, 0
    %v1159 = vsel %vm1130, %v1107, 0
    %v1162 = vsel %vm1130, %v1108, 0
    %v1165 = vsel %vm1130, %v1109, 0
    %v1168 = vsel %vm1130, %v1110, 0
    %v1171 = vsel %vm1130, %v1111, 0
    %v1174 = vsel %vm1130, %v1112, 0
    %v1177 = vsel %vm1130, %v1113, 0
    %v1180 = vsel %vm773, %v1094, 0
    %1182 = vmatpush.msra.mxu0 0.0
    %1183 = vmatpush.msra.mxu0 0.0
    %1184 = vmatpush.msra.mxu0 0.0
    %1185 = vmatpush.msra.mxu0 0.0
    %1186 = vmatpush.msra.mxu0 0.0
    %1187 = vmatpush.msra.mxu0 0.0
    %1188 = vmatpush.msra.mxu0 0.0
    %1189 = vmatpush.msra.mxu0 0.0
    %1190 = vmatpush.msra.mxu0 0.0
    %1191 = vmatpush.msra.mxu0 0.0
    %1192 = vmatpush.msra.mxu0 0.0
    %1193 = vmatpush.msra.mxu0 0.0
    %1194 = vmatpush.msra.mxu0 0.0
    %1195 = vmatpush.msra.mxu0 0.0
    %1196 = vmatpush.msra.mxu0 0.0
    %1197 = vmatpush.msra.mxu0 %v1180
    %1198 = vmatmul.f32.gmra.mxu0 %v1132
    %v1199 = vpop.f32.mrf.mxu0
    %v1200 = vadd.f32 0.0, %v1199
    %1201 = vmatmul.f32.gmra.mxu0 %v1135
    %v1202 = vpop.f32.mrf.mxu0
    %v1203 = vadd.f32 0.0, %v1202
    %1204 = vmatmul.f32.gmra.mxu0 %v1138
    %v1205 = vpop.f32.mrf.mxu0
    %v1206 = vadd.f32 0.0, %v1205
    %1207 = vmatmul.f32.gmra.mxu0 %v1141
    %v1208 = vpop.f32.mrf.mxu0
    %v1209 = vadd.f32 0.0, %v1208
    %1210 = vmatmul.f32.gmra.mxu0 %v1144
    %v1211 = vpop.f32.mrf.mxu0
    %v1212 = vadd.f32 0.0, %v1211
    %1213 = vmatmul.f32.gmra.mxu0 %v1147
    %v1214 = vpop.f32.mrf.mxu0
    %v1215 = vadd.f32 0.0, %v1214
    %1216 = vmatmul.f32.gmra.mxu0 %v1150
    %v1217 = vpop.f32.mrf.mxu0
    %v1218 = vadd.f32 0.0, %v1217
    %1219 = vmatmul.f32.gmra.mxu0 %v1153
    %v1220 = vpop.f32.mrf.mxu0
    %v1221 = vadd.f32 0.0, %v1220
    %1222 = vmatmul.f32.gmra.mxu0 %v1156
    %v1223 = vpop.f32.mrf.mxu0
    %v1224 = vadd.f32 0.0, %v1223
    %1225 = vmatmul.f32.gmra.mxu0 %v1159
    %v1226 = vpop.f32.mrf.mxu0
    %v1227 = vadd.f32 0.0, %v1226
    %1228 = vmatmul.f32.gmra.mxu0 %v1162
    %v1229 = vpop.f32.mrf.mxu0
    %v1230 = vadd.f32 0.0, %v1229
    %1231 = vmatmul.f32.gmra.mxu0 %v1165
    %v1232 = vpop.f32.mrf.mxu0
    %v1233 = vadd.f32 0.0, %v1232
    %1234 = vmatmul.f32.gmra.mxu0 %v1168
    %v1235 = vpop.f32.mrf.mxu0
    %v1236 = vadd.f32 0.0, %v1235
    %1237 = vmatmul.f32.gmra.mxu0 %v1171
    %v1238 = vpop.f32.mrf.mxu0
    %v1239 = vadd.f32 0.0, %v1238
    %1240 = vmatmul.f32.gmra.mxu0 %v1174
    %v1241 = vpop.f32.mrf.mxu0
    %v1242 = vadd.f32 0.0, %v1241
    %1243 = vmatmul.f32.gmra.mxu0 %v1177
    %v1244 = vpop.f32.mrf.mxu0
    %v1245 = vadd.f32 0.0, %v1244
    %1246 = vdwg.mxu0
    %v1247 = vmul.f32 %v1200, %v1114
    %v1248 = vmul.f32 %v1203, %v1115
    %v1249 = vmul.f32 %v1206, %v1116
    %v1250 = vmul.f32 %v1209, %v1117
    %v1251 = vmul.f32 %v1212, %v1118
    %v1252 = vmul.f32 %v1215, %v1119
    %v1253 = vmul.f32 %v1218, %v1120
    %v1254 = vmul.f32 %v1221, %v1121
    %v1255 = vmul.f32 %v1224, %v1122
    %v1256 = vmul.f32 %v1227, %v1123
    %v1257 = vmul.f32 %v1230, %v1124
    %v1258 = vmul.f32 %v1233, %v1125
    %v1259 = vmul.f32 %v1236, %v1126
    %v1260 = vmul.f32 %v1239, %v1127
    %v1261 = vmul.f32 %v1242, %v1128
    %v1262 = vmul.f32 %v1245, %v1129
    %v1264 = vsel %vm773, %v1097, 0
    %1266 = vmatpush.msra.mxu0 0.0
    %1267 = vmatpush.msra.mxu0 0.0
    %1268 = vmatpush.msra.mxu0 0.0
    %1269 = vmatpush.msra.mxu0 0.0
    %1270 = vmatpush.msra.mxu0 0.0
    %1271 = vmatpush.msra.mxu0 0.0
    %1272 = vmatpush.msra.mxu0 0.0
    %1273 = vmatpush.msra.mxu0 0.0
    %1274 = vmatpush.msra.mxu0 0.0
    %1275 = vmatpush.msra.mxu0 0.0
    %1276 = vmatpush.msra.mxu0 0.0
    %1277 = vmatpush.msra.mxu0 0.0
    %1278 = vmatpush.msra.mxu0 0.0
    %1279 = vmatpush.msra.mxu0 0.0
    %1280 = vmatpush.msra.mxu0 0.0
    %1281 = vmatpush.msra.mxu0 %v1264
    %1282 = vmatmul.f32.gmra.mxu0 %v1132
    %v1283 = vpop.f32.mrf.mxu0
    %v1284 = vadd.f32 0.0, %v1283
    %1285 = vmatmul.f32.gmra.mxu0 %v1135
    %v1286 = vpop.f32.mrf.mxu0
    %v1287 = vadd.f32 0.0, %v1286
    %1288 = vmatmul.f32.gmra.mxu0 %v1138
    %v1289 = vpop.f32.mrf.mxu0
    %v1290 = vadd.f32 0.0, %v1289
    %1291 = vmatmul.f32.gmra.mxu0 %v1141
    %v1292 = vpop.f32.mrf.mxu0
    %v1293 = vadd.f32 0.0, %v1292
    %1294 = vmatmul.f32.gmra.mxu0 %v1144
    %v1295 = vpop.f32.mrf.mxu0
    %v1296 = vadd.f32 0.0, %v1295
    %1297 = vmatmul.f32.gmra.mxu0 %v1147
    %v1298 = vpop.f32.mrf.mxu0
    %v1299 = vadd.f32 0.0, %v1298
    %1300 = vmatmul.f32.gmra.mxu0 %v1150
    %v1301 = vpop.f32.mrf.mxu0
    %v1302 = vadd.f32 0.0, %v1301
    %1303 = vmatmul.f32.gmra.mxu0 %v1153
    %v1304 = vpop.f32.mrf.mxu0
    %v1305 = vadd.f32 0.0, %v1304
    %1306 = vmatmul.f32.gmra.mxu0 %v1156
    %v1307 = vpop.f32.mrf.mxu0
    %v1308 = vadd.f32 0.0, %v1307
    %1309 = vmatmul.f32.gmra.mxu0 %v1159
    %v1310 = vpop.f32.mrf.mxu0
    %v1311 = vadd.f32 0.0, %v1310
    %1312 = vmatmul.f32.gmra.mxu0 %v1162
    %v1313 = vpop.f32.mrf.mxu0
    %v1314 = vadd.f32 0.0, %v1313
    %1315 = vmatmul.f32.gmra.mxu0 %v1165
    %v1316 = vpop.f32.mrf.mxu0
    %v1317 = vadd.f32 0.0, %v1316
    %1318 = vmatmul.f32.gmra.mxu0 %v1168
    %v1319 = vpop.f32.mrf.mxu0
    %v1320 = vadd.f32 0.0, %v1319
    %1321 = vmatmul.f32.gmra.mxu0 %v1171
    %v1322 = vpop.f32.mrf.mxu0
    %v1323 = vadd.f32 0.0, %v1322
    %1324 = vmatmul.f32.gmra.mxu0 %v1174
    %v1325 = vpop.f32.mrf.mxu0
    %v1326 = vadd.f32 0.0, %v1325
    %1327 = vmatmul.f32.gmra.mxu0 %v1177
    %v1328 = vpop.f32.mrf.mxu0
    %v1329 = vadd.f32 0.0, %v1328
    %1330 = vdwg.mxu0
    %v1331 = vmul.f32 %v1284, %v1114
    %v1332 = vmul.f32 %v1287, %v1115
    %v1333 = vmul.f32 %v1290, %v1116
    %v1334 = vmul.f32 %v1293, %v1117
    %v1335 = vmul.f32 %v1296, %v1118
    %v1336 = vmul.f32 %v1299, %v1119
    %v1337 = vmul.f32 %v1302, %v1120
    %v1338 = vmul.f32 %v1305, %v1121
    %v1339 = vmul.f32 %v1308, %v1122
    %v1340 = vmul.f32 %v1311, %v1123
    %v1341 = vmul.f32 %v1314, %v1124
    %v1342 = vmul.f32 %v1317, %v1125
    %v1343 = vmul.f32 %v1320, %v1126
    %v1344 = vmul.f32 %v1323, %v1127
    %v1345 = vmul.f32 %v1326, %v1128
    %v1346 = vmul.f32 %v1329, %v1129
    %1347 = vmatpush.xpose.msra.mxu0 %v1262
    %1348 = vmatpush.xpose.msra.mxu0 %v1261
    %1349 = vmatpush.xpose.msra.mxu0 %v1260
    %1350 = vmatpush.xpose.msra.mxu0 %v1259
    %1351 = vmatpush.xpose.msra.mxu0 %v1258
    %1352 = vmatpush.xpose.msra.mxu0 %v1257
    %1353 = vmatpush.xpose.msra.mxu0 %v1256
    %1354 = vmatpush.xpose.msra.mxu0 %v1255
    %1355 = vmatpush.xpose.msra.mxu0 %v1254
    %1356 = vmatpush.xpose.msra.mxu0 %v1253
    %1357 = vmatpush.xpose.msra.mxu0 %v1252
    %1358 = vmatpush.xpose.msra.mxu0 %v1251
    %1359 = vmatpush.xpose.msra.mxu0 %v1250
    %1360 = vmatpush.xpose.msra.mxu0 %v1249
    %1361 = vmatpush.xpose.msra.mxu0 %v1248
    %1362 = vmatpush.xpose.msra.mxu0 %v1247
    %1363 = vmatmul.f32.gmra.mxu0 %v1091
    %v1364 = vpop.f32.mrf.mxu0
    %v1365 = vadd.f32 0.0, %v1364
    %1366 = vdwg.mxu0
    %v1367 = vmul.f32 %v1365, 0.5
    %1368 = vmax.xlane.f32.xlu0 %v1367
    %v1369 = vpop.xlane.xlu0 %1368
    %v1370 = vsub.f32 %v1367, %v1369
    %v1371 = vmul.f32 %v1370, 1.442695
    %v1372 = vpow.pop %v1371
    %1373 = vmatpush.msra.mxu0 %v1346
    %1374 = vmatpush.msra.mxu0 %v1345
    %1375 = vmatpush.msra.mxu0 %v1344
    %1376 = vmatpush.msra.mxu0 %v1343
    %1377 = vmatpush.msra.mxu0 %v1342
    %1378 = vmatpush.msra.mxu0 %v1341
    %1379 = vmatpush.msra.mxu0 %v1340
    %1380 = vmatpush.msra.mxu0 %v1339
    %1381 = vmatpush.msra.mxu0 %v1338
    %1382 = vmatpush.msra.mxu0 %v1337
    %1383 = vmatpush.msra.mxu0 %v1336
    %1384 = vmatpush.msra.mxu0 %v1335
    %1385 = vmatpush.msra.mxu0 %v1334
    %1386 = vmatpush.msra.mxu0 %v1333
    %1387 = vmatpush.msra.mxu0 %v1332
    %1388 = vmatpush.msra.mxu0 %v1331
    %1389 = vmatmul.f32.gmra.mxu0 %v1372
    %v1390 = vpop.f32.mrf.mxu0
    %v1391 = vadd.f32 0.0, %v1390
    %1392 = vdwg.mxu0
    %1393 = vmatpush.msra.mxu0 %v1129
    %1394 = vmatpush.msra.mxu0 %v1128
    %1395 = vmatpush.msra.mxu0 %v1127
    %1396 = vmatpush.msra.mxu0 %v1126
    %1397 = vmatpush.msra.mxu0 %v1125
    %1398 = vmatpush.msra.mxu0 %v1124
    %1399 = vmatpush.msra.mxu0 %v1123
    %1400 = vmatpush.msra.mxu0 %v1122
    %1401 = vmatpush.msra.mxu0 %v1121
    %1402 = vmatpush.msra.mxu0 %v1120
    %1403 = vmatpush.msra.mxu0 %v1119
    %1404 = vmatpush.msra.mxu0 %v1118
    %1405 = vmatpush.msra.mxu0 %v1117
    %1406 = vmatpush.msra.mxu0 %v1116
    %1407 = vmatpush.msra.mxu0 %v1115
    %1408 = vmatpush.msra.mxu0 %v1114
    %1409 = vmatmul.f32.gmra.mxu0 %v1372
    %v1410 = vpop.f32.mrf.mxu0
    %v1411 = vadd.f32 0.0, %v1410
    %1412 = vdwg.mxu0
    %v1413 = vrcp.pop %v1411
    %v1414 = vmul.f32 %v1411, %v1413
    %v1415 = vsub.f32 1.0, %v1414
    %v1416 = vmul.f32 %v1413, %v1415
    %v1417 = vadd.f32 %v1413, %v1416
    %vm1418 = vweird.f32 %v1411
    %vm1419 = vweird.f32 %v1413
    %vm1420 = vmor %vm1418, %vm1419
    %v1421 = vsel %vm1420, %v1413, %v1417
    %v1422 = vand.u32 2147483647, %v1411
    %vm1423 = vcmp.eq.f32.partialorder %v1422, 8.507059e+37
    %v1424 = vand.u32 %v1411, 2147483648
    %v1425 = vor.u32 1.1754944e-38, %v1424
    %v1426 = vsel %vm1423, %v1425, %v1421
    %v1427 = vmul.f32 %v1391, %v1426
    %v1428 = vld [vmem:[#allocation5 + $0x60] sm:$0xff]
    %v1429 = vld [vmem:[#allocation5 + $0xc8] sm:$0xff]
    %v1430 = vld [vmem:[#allocation5 + $0x130] sm:$0xff]
    %v1431 = vld [vmem:[#allocation5 + $0x198] sm:$0xff]
    %v1432 = vld [vmem:[#allocation5 + $0x200] sm:$0xff]
    %v1433 = vld [vmem:[#allocation5 + $0x268] sm:$0xff]
    %v1434 = vld [vmem:[#allocation5 + $0x2d0] sm:$0xff]
    %v1435 = vld [vmem:[#allocation5 + $0x338] sm:$0xff]
    %v1436 = vld [vmem:[#allocation5 + $0x3a0] sm:$0xff]
    %v1437 = vld [vmem:[#allocation5 + $0x408] sm:$0xff]
    %v1438 = vld [vmem:[#allocation5 + $0x470] sm:$0xff]
    %v1439 = vld [vmem:[#allocation5 + $0x4d8] sm:$0xff]
    %v1440 = vld [vmem:[#allocation5 + $0x540] sm:$0xff]
    %v1441 = vld [vmem:[#allocation5 + $0x5a8] sm:$0xff]
    %v1442 = vld [vmem:[#allocation5 + $0x610] sm:$0xff]
    %v1443 = vld [vmem:[#allocation5 + $0x678] sm:$0xff]
    %1444 = vmatpush.msra.mxu0 %v1443
    %1445 = vmatpush.msra.mxu0 %v1442
    %1446 = vmatpush.msra.mxu0 %v1441
    %1447 = vmatpush.msra.mxu0 %v1440
    %1448 = vmatpush.msra.mxu0 %v1439
    %1449 = vmatpush.msra.mxu0 %v1438
    %1450 = vmatpush.msra.mxu0 %v1437
    %1451 = vmatpush.msra.mxu0 %v1436
    %1452 = vmatpush.msra.mxu0 %v1435
    %1453 = vmatpush.msra.mxu0 %v1434
    %1454 = vmatpush.msra.mxu0 %v1433
    %1455 = vmatpush.msra.mxu0 %v1432
    %1456 = vmatpush.msra.mxu0 %v1431
    %1457 = vmatpush.msra.mxu0 %v1430
    %1458 = vmatpush.msra.mxu0 %v1429
    %1459 = vmatpush.msra.mxu0 %v1428
    %1460 = vmatmul.f32.gmra.mxu0 %v1427
    %v1461 = vpop.f32.mrf.mxu0
    %v1462 = vadd.f32 0.0, %v1461
    %1463 = vdwg.mxu0
    %v1464 = vadd.f32 %v76, %v1462
    %v1465 = vld [vmem:[#allocation7 + $0x54c] sm:$0x1]
    %v1466 = vperm.slane %v1465, 0
    %v1467 = vadd.f32 %v1464, %v1466
    %v1468 = vld [vmem:[#allocation7 + $0x550] sm:$0x1]
    %v1469 = vld [vmem:[#allocation7 + $0x551] sm:$0x1]
    %1470 = vmatpush.msra.mxu0 %v75
    %1471 = vmatpush.msra.mxu0 %v74
    %1472 = vmatpush.msra.mxu0 %v73
    %1473 = vmatpush.msra.mxu0 %v72
    %1474 = vmatpush.msra.mxu0 %v71
    %1475 = vmatpush.msra.mxu0 %v70
    %1476 = vmatpush.msra.mxu0 %v69
    %1477 = vmatpush.msra.mxu0 %v68
    %1478 = vmatpush.msra.mxu0 %v67
    %1479 = vmatpush.msra.mxu0 %v66
    %1480 = vmatpush.msra.mxu0 %v65
    %1481 = vmatpush.msra.mxu0 %v64
    %1482 = vmatpush.msra.mxu0 %v63
    %1483 = vmatpush.msra.mxu0 %v62
    %1484 = vmatpush.msra.mxu0 %v61
    %1485 = vmatpush.msra.mxu0 %v60
    %1486 = vmatmul.f32.gmra.mxu0 %v1467
    %v1487 = vpop.f32.mrf.mxu0
    %v1488 = vadd.f32 0.0, %v1487
    %1489 = vdwg.mxu0
    %v1490 = vsub.f32 %v1467, %v1488
    %v1491 = vmul.f32 %v1490, %v1490
    %1492 = vmatpush.msra.mxu0 %v75
    %1493 = vmatpush.msra.mxu0 %v74
    %1494 = vmatpush.msra.mxu0 %v73
    %1495 = vmatpush.msra.mxu0 %v72
    %1496 = vmatpush.msra.mxu0 %v71
    %1497 = vmatpush.msra.mxu0 %v70
    %1498 = vmatpush.msra.mxu0 %v69
    %1499 = vmatpush.msra.mxu0 %v68
    %1500 = vmatpush.msra.mxu0 %v67
    %1501 = vmatpush.msra.mxu0 %v66
    %1502 = vmatpush.msra.mxu0 %v65
    %1503 = vmatpush.msra.mxu0 %v64
    %1504 = vmatpush.msra.mxu0 %v63
    %1505 = vmatpush.msra.mxu0 %v62
    %1506 = vmatpush.msra.mxu0 %v61
    %1507 = vmatpush.msra.mxu0 %v60
    %1508 = vmatmul.f32.gmra.mxu0 %v1491
    %v1509 = vpop.f32.mrf.mxu0
    %v1510 = vadd.f32 1e-05, %v1509
    %1511 = vdwg.mxu0
    %v1512 = vrsqrt.pop %v1510
    %v1513 = vmul.f32 %v1512, %v1510
    %v1514 = vmul.f32 %v1513, %v1512
    %v1515 = vmul.f32 0.5, %v1514
    %v1516 = vsub.f32 1.5, %v1515
    %v1517 = vmul.f32 %v1512, %v1516
    %vm1518 = vweird.f32 %v1510
    %vm1519 = vweird.f32 %v1512
    %vm1520 = vmor %vm1518, %vm1519
    %v1521 = vsel %vm1520, %v1512, %v1517
    %v1522 = vmul.f32 %v1490, %v1521
    %v1523 = vperm.slane %v1468, 0
    %v1524 = vmul.f32 %v1522, %v1523
    %v1525 = vperm.slane %v1469, 0
    %v1526 = vadd.f32 %v1524, %v1525
    %v1527 = vld [vmem:[#allocation7 + $0x540] sm:$0xf]
    %v1529 = vrot.slane %v1527, 1
    %v1531 = vrot.slane %v1527, 2
    %v1533 = vrot.slane %v1527, 3
    %v1535 = vld [vmem:[#allocation5 + $0x38] sm:$0xff]
    %v1536 = vld [vmem:[#allocation5 + $0x40] sm:$0xff]
    %v1537 = vld [vmem:[#allocation5 + $0x48] sm:$0xff]
    %v1538 = vld [vmem:[#allocation5 + $0x50] sm:$0xff]
    %v1539 = vld [vmem:[#allocation5 + $0xa0] sm:$0xff]
    %v1540 = vld [vmem:[#allocation5 + $0xa8] sm:$0xff]
    %v1541 = vld [vmem:[#allocation5 + $0xb0] sm:$0xff]
    %v1542 = vld [vmem:[#allocation5 + $0xb8] sm:$0xff]
    %v1543 = vld [vmem:[#allocation5 + $0x108] sm:$0xff]
    %v1544 = vld [vmem:[#allocation5 + $0x110] sm:$0xff]
    %v1545 = vld [vmem:[#allocation5 + $0x118] sm:$0xff]
    %v1546 = vld [vmem:[#allocation5 + $0x120] sm:$0xff]
    %v1547 = vld [vmem:[#allocation5 + $0x170] sm:$0xff]
    %v1548 = vld [vmem:[#allocation5 + $0x178] sm:$0xff]
    %v1549 = vld [vmem:[#allocation5 + $0x180] sm:$0xff]
    %v1550 = vld [vmem:[#allocation5 + $0x188] sm:$0xff]
    %v1551 = vld [vmem:[#allocation5 + $0x1d8] sm:$0xff]
    %v1552 = vld [vmem:[#allocation5 + $0x1e0] sm:$0xff]
    %v1553 = vld [vmem:[#allocation5 + $0x1e8] sm:$0xff]
    %v1554 = vld [vmem:[#allocation5 + $0x1f0] sm:$0xff]
    %v1555 = vld [vmem:[#allocation5 + $0x240] sm:$0xff]
    %v1556 = vld [vmem:[#allocation5 + $0x248] sm:$0xff]
    %v1557 = vld [vmem:[#allocation5 + $0x250] sm:$0xff]
    %v1558 = vld [vmem:[#allocation5 + $0x258] sm:$0xff]
    %v1559 = vld [vmem:[#allocation5 + $0x2a8] sm:$0xff]
    %v1560 = vld [vmem:[#allocation5 + $0x2b0] sm:$0xff]
    %v1561 = vld [vmem:[#allocation5 + $0x2b8] sm:$0xff]
    %v1562 = vld [vmem:[#allocation5 + $0x2c0] sm:$0xff]
    %v1563 = vld [vmem:[#allocation5 + $0x310] sm:$0xff]
    %v1564 = vld [vmem:[#allocation5 + $0x318] sm:$0xff]
    %v1565 = vld [vmem:[#allocation5 + $0x320] sm:$0xff]
    %v1566 = vld [vmem:[#allocation5 + $0x328] sm:$0xff]
    %v1567 = vld [vmem:[#allocation5 + $0x378] sm:$0xff]
    %v1568 = vld [vmem:[#allocation5 + $0x380] sm:$0xff]
    %v1569 = vld [vmem:[#allocation5 + $0x388] sm:$0xff]
    %v1570 = vld [vmem:[#allocation5 + $0x390] sm:$0xff]
    %v1571 = vld [vmem:[#allocation5 + $0x3e0] sm:$0xff]
    %v1572 = vld [vmem:[#allocation5 + $0x3e8] sm:$0xff]
    %v1573 = vld [vmem:[#allocation5 + $0x3f0] sm:$0xff]
    %v1574 = vld [vmem:[#allocation5 + $0x3f8] sm:$0xff]
    %v1575 = vld [vmem:[#allocation5 + $0x448] sm:$0xff]
    %v1576 = vld [vmem:[#allocation5 + $0x450] sm:$0xff]
    %v1577 = vld [vmem:[#allocation5 + $0x458] sm:$0xff]
    %v1578 = vld [vmem:[#allocation5 + $0x460] sm:$0xff]
    %v1579 = vld [vmem:[#allocation5 + $0x4b0] sm:$0xff]
    %v1580 = vld [vmem:[#allocation5 + $0x4b8] sm:$0xff]
    %v1581 = vld [vmem:[#allocation5 + $0x4c0] sm:$0xff]
    %v1582 = vld [vmem:[#allocation5 + $0x4c8] sm:$0xff]
    %v1583 = vld [vmem:[#allocation5 + $0x518] sm:$0xff]
    %v1584 = vld [vmem:[#allocation5 + $0x520] sm:$0xff]
    %v1585 = vld [vmem:[#allocation5 + $0x528] sm:$0xff]
    %v1586 = vld [vmem:[#allocation5 + $0x530] sm:$0xff]
    %v1587 = vld [vmem:[#allocation5 + $0x580] sm:$0xff]
    %v1588 = vld [vmem:[#allocation5 + $0x588] sm:$0xff]
    %v1589 = vld [vmem:[#allocation5 + $0x590] sm:$0xff]
    %v1590 = vld [vmem:[#allocation5 + $0x598] sm:$0xff]
    %v1591 = vld [vmem:[#allocation5 + $0x5e8] sm:$0xff]
    %v1592 = vld [vmem:[#allocation5 + $0x5f0] sm:$0xff]
    %v1593 = vld [vmem:[#allocation5 + $0x5f8] sm:$0xff]
    %v1594 = vld [vmem:[#allocation5 + $0x600] sm:$0xff]
    %v1595 = vld [vmem:[#allocation5 + $0x650] sm:$0xff]
    %v1596 = vld [vmem:[#allocation5 + $0x658] sm:$0xff]
    %v1597 = vld [vmem:[#allocation5 + $0x660] sm:$0xff]
    %v1598 = vld [vmem:[#allocation5 + $0x668] sm:$0xff]
    %v1599 = vperm.slane %v1527, 0
    %v1600 = vperm.slane %v1529, 0
    %v1601 = vperm.slane %v1531, 0
    %v1602 = vperm.slane %v1533, 0
    %1603 = vmatpush.msra.mxu0 %v1595
    %1604 = vmatpush.msra.mxu0 %v1591
    %1605 = vmatpush.msra.mxu0 %v1587
    %1606 = vmatpush.msra.mxu0 %v1583
    %1607 = vmatpush.msra.mxu0 %v1579
    %1608 = vmatpush.msra.mxu0 %v1575
    %1609 = vmatpush.msra.mxu0 %v1571
    %1610 = vmatpush.msra.mxu0 %v1567
    %1611 = vmatpush.msra.mxu0 %v1563
    %1612 = vmatpush.msra.mxu0 %v1559
    %1613 = vmatpush.msra.mxu0 %v1555
    %1614 = vmatpush.msra.mxu0 %v1551
    %1615 = vmatpush.msra.mxu0 %v1547
    %1616 = vmatpush.msra.mxu0 %v1543
    %1617 = vmatpush.msra.mxu0 %v1539
    %1618 = vmatpush.msra.mxu0 %v1535
    %1619 = vmatmul.f32.gmra.mxu0 %v1526
    %v1620 = vpop.f32.mrf.mxu0
    %v1621 = vadd.f32 %v1599, %v1620
    %1622 = vdwg.mxu0
    %1623 = vmatpush.msra.mxu0 %v1596
    %1624 = vmatpush.msra.mxu0 %v1592
    %1625 = vmatpush.msra.mxu0 %v1588
    %1626 = vmatpush.msra.mxu0 %v1584
    %1627 = vmatpush.msra.mxu0 %v1580
    %1628 = vmatpush.msra.mxu0 %v1576
    %1629 = vmatpush.msra.mxu0 %v1572
    %1630 = vmatpush.msra.mxu0 %v1568
    %1631 = vmatpush.msra.mxu0 %v1564
    %1632 = vmatpush.msra.mxu0 %v1560
    %1633 = vmatpush.msra.mxu0 %v1556
    %1634 = vmatpush.msra.mxu0 %v1552
    %1635 = vmatpush.msra.mxu0 %v1548
    %1636 = vmatpush.msra.mxu0 %v1544
    %1637 = vmatpush.msra.mxu0 %v1540
    %1638 = vmatpush.msra.mxu0 %v1536
    %1639 = vmatmul.f32.gmra.mxu0 %v1526
    %v1640 = vpop.f32.mrf.mxu0
    %v1641 = vadd.f32 %v1600, %v1640
    %1642 = vdwg.mxu0
    %1643 = vmatpush.msra.mxu0 %v1597
    %1644 = vmatpush.msra.mxu0 %v1593
    %1645 = vmatpush.msra.mxu0 %v1589
    %1646 = vmatpush.msra.mxu0 %v1585
    %1647 = vmatpush.msra.mxu0 %v1581
    %1648 = vmatpush.msra.mxu0 %v1577
    %1649 = vmatpush.msra.mxu0 %v1573
    %1650 = vmatpush.msra.mxu0 %v1569
    %1651 = vmatpush.msra.mxu0 %v1565
    %1652 = vmatpush.msra.mxu0 %v1561
    %1653 = vmatpush.msra.mxu0 %v1557
    %1654 = vmatpush.msra.mxu0 %v1553
    %1655 = vmatpush.msra.mxu0 %v1549
    %1656 = vmatpush.msra.mxu0 %v1545
    %1657 = vmatpush.msra.mxu0 %v1541
    %1658 = vmatpush.msra.mxu0 %v1537
    %1659 = vmatmul.f32.gmra.mxu0 %v1526
    %v1660 = vpop.f32.mrf.mxu0
    %v1661 = vadd.f32 %v1601, %v1660
    %1662 = vdwg.mxu0
    %1663 = vmatpush.msra.mxu0 %v1598
    %1664 = vmatpush.msra.mxu0 %v1594
    %1665 = vmatpush.msra.mxu0 %v1590
    %1666 = vmatpush.msra.mxu0 %v1586
    %1667 = vmatpush.msra.mxu0 %v1582
    %1668 = vmatpush.msra.mxu0 %v1578
    %1669 = vmatpush.msra.mxu0 %v1574
    %1670 = vmatpush.msra.mxu0 %v1570
    %1671 = vmatpush.msra.mxu0 %v1566
    %1672 = vmatpush.msra.mxu0 %v1562
    %1673 = vmatpush.msra.mxu0 %v1558
    %1674 = vmatpush.msra.mxu0 %v1554
    %1675 = vmatpush.msra.mxu0 %v1550
    %1676 = vmatpush.msra.mxu0 %v1546
    %1677 = vmatpush.msra.mxu0 %v1542
    %1678 = vmatpush.msra.mxu0 %v1538
    %1679 = vmatmul.f32.gmra.mxu0 %v1526
    %v1680 = vpop.f32.mrf.mxu0
    %v1681 = vadd.f32 %v1602, %v1680
    %1682 = vdwg.mxu0
    %v1683 = vmax.f32 %v1621, 0.0
    %v1684 = vmax.f32 %v1641, 0.0
    %v1685 = vmax.f32 %v1661, 0.0
    %v1686 = vmax.f32 %v1681, 0.0
    %v1687 = vld [vmem:[#allocation7] sm:$0xff]
    %v1688 = vld [vmem:[#allocation7 + $0x8] sm:$0xff]
    %v1689 = vld [vmem:[#allocation7 + $0x10] sm:$0xff]
    %v1690 = vld [vmem:[#allocation7 + $0x18] sm:$0xff]
    %v1691 = vld [vmem:[#allocation7 + $0x20] sm:$0xff]
    %v1692 = vld [vmem:[#allocation7 + $0x28] sm:$0xff]
    %v1693 = vld [vmem:[#allocation7 + $0x30] sm:$0xff]
    %v1694 = vld [vmem:[#allocation7 + $0x38] sm:$0xff]
    %v1695 = vld [vmem:[#allocation7 + $0x40] sm:$0xff]
    %v1696 = vld [vmem:[#allocation7 + $0x48] sm:$0xff]
    %v1697 = vld [vmem:[#allocation7 + $0x50] sm:$0xff]
    %v1698 = vld [vmem:[#allocation7 + $0x58] sm:$0xff]
    %v1699 = vld [vmem:[#allocation7 + $0x60] sm:$0xff]
    %v1700 = vld [vmem:[#allocation7 + $0x68] sm:$0xff]
    %v1701 = vld [vmem:[#allocation7 + $0x70] sm:$0xff]
    %v1702 = vld [vmem:[#allocation7 + $0x78] sm:$0xff]
    %v1703 = vld [vmem:[#allocation7 + $0x80] sm:$0xff]
    %v1704 = vld [vmem:[#allocation7 + $0x88] sm:$0xff]
    %v1705 = vld [vmem:[#allocation7 + $0x90] sm:$0xff]
    %v1706 = vld [vmem:[#allocation7 + $0x98] sm:$0xff]
    %v1707 = vld [vmem:[#allocation7 + $0xa0] sm:$0xff]
    %v1708 = vld [vmem:[#allocation7 + $0xa8] sm:$0xff]
    %v1709 = vld [vmem:[#allocation7 + $0xb0] sm:$0xff]
    %v1710 = vld [vmem:[#allocation7 + $0xb8] sm:$0xff]
    %v1711 = vld [vmem:[#allocation7 + $0xc0] sm:$0xff]
    %v1712 = vld [vmem:[#allocation7 + $0xc8] sm:$0xff]
    %v1713 = vld [vmem:[#allocation7 + $0xd0] sm:$0xff]
    %v1714 = vld [vmem:[#allocation7 + $0xd8] sm:$0xff]
    %v1715 = vld [vmem:[#allocation7 + $0xe0] sm:$0xff]
    %v1716 = vld [vmem:[#allocation7 + $0xe8] sm:$0xff]
    %v1717 = vld [vmem:[#allocation7 + $0xf0] sm:$0xff]
    %v1718 = vld [vmem:[#allocation7 + $0xf8] sm:$0xff]
    %v1719 = vld [vmem:[#allocation7 + $0x100] sm:$0xff]
    %v1720 = vld [vmem:[#allocation7 + $0x108] sm:$0xff]
    %v1721 = vld [vmem:[#allocation7 + $0x110] sm:$0xff]
    %v1722 = vld [vmem:[#allocation7 + $0x118] sm:$0xff]
    %v1723 = vld [vmem:[#allocation7 + $0x120] sm:$0xff]
    %v1724 = vld [vmem:[#allocation7 + $0x128] sm:$0xff]
    %v1725 = vld [vmem:[#allocation7 + $0x130] sm:$0xff]
    %v1726 = vld [vmem:[#allocation7 + $0x138] sm:$0xff]
    %v1727 = vld [vmem:[#allocation7 + $0x140] sm:$0xff]
    %v1728 = vld [vmem:[#allocation7 + $0x148] sm:$0xff]
    %v1729 = vld [vmem:[#allocation7 + $0x150] sm:$0xff]
    %v1730 = vld [vmem:[#allocation7 + $0x158] sm:$0xff]
    %v1731 = vld [vmem:[#allocation7 + $0x160] sm:$0xff]
    %v1732 = vld [vmem:[#allocation7 + $0x168] sm:$0xff]
    %v1733 = vld [vmem:[#allocation7 + $0x170] sm:$0xff]
    %v1734 = vld [vmem:[#allocation7 + $0x178] sm:$0xff]
    %v1735 = vld [vmem:[#allocation7 + $0x180] sm:$0xff]
    %v1736 = vld [vmem:[#allocation7 + $0x188] sm:$0xff]
    %v1737 = vld [vmem:[#allocation7 + $0x190] sm:$0xff]
    %v1738 = vld [vmem:[#allocation7 + $0x198] sm:$0xff]
    %v1739 = vld [vmem:[#allocation7 + $0x1a0] sm:$0xff]
    %v1740 = vld [vmem:[#allocation7 + $0x1a8] sm:$0xff]
    %v1741 = vld [vmem:[#allocation7 + $0x1b0] sm:$0xff]
    %v1742 = vld [vmem:[#allocation7 + $0x1b8] sm:$0xff]
    %v1743 = vld [vmem:[#allocation7 + $0x1c0] sm:$0xff]
    %v1744 = vld [vmem:[#allocation7 + $0x1c8] sm:$0xff]
    %v1745 = vld [vmem:[#allocation7 + $0x1d0] sm:$0xff]
    %v1746 = vld [vmem:[#allocation7 + $0x1d8] sm:$0xff]
    %v1747 = vld [vmem:[#allocation7 + $0x1e0] sm:$0xff]
    %v1748 = vld [vmem:[#allocation7 + $0x1e8] sm:$0xff]
    %v1749 = vld [vmem:[#allocation7 + $0x1f0] sm:$0xff]
    %v1750 = vld [vmem:[#allocation7 + $0x1f8] sm:$0xff]
    %1751 = vmatpush.msra.mxu0 %v1702
    %1752 = vmatpush.msra.mxu0 %v1701
    %1753 = vmatpush.msra.mxu0 %v1700
    %1754 = vmatpush.msra.mxu0 %v1699
    %1755 = vmatpush.msra.mxu0 %v1698
    %1756 = vmatpush.msra.mxu0 %v1697
    %1757 = vmatpush.msra.mxu0 %v1696
    %1758 = vmatpush.msra.mxu0 %v1695
    %1759 = vmatpush.msra.mxu0 %v1694
    %1760 = vmatpush.msra.mxu0 %v1693
    %1761 = vmatpush.msra.mxu0 %v1692
    %1762 = vmatpush.msra.mxu0 %v1691
    %1763 = vmatpush.msra.mxu0 %v1690
    %1764 = vmatpush.msra.mxu0 %v1689
    %1765 = vmatpush.msra.mxu0 %v1688
    %1766 = vmatpush.msra.mxu0 %v1687
    %1767 = vmatmul.f32.gmra.mxu0 %v1683
    %v1768 = vpop.f32.mrf.mxu0
    %v1769 = vadd.f32 0.0, %v1768
    %1770 = vdwg.mxu0
    %1771 = vmatpush.msra.mxu0 %v1718
    %1772 = vmatpush.msra.mxu0 %v1717
    %1773 = vmatpush.msra.mxu0 %v1716
    %1774 = vmatpush.msra.mxu0 %v1715
    %1775 = vmatpush.msra.mxu0 %v1714
    %1776 = vmatpush.msra.mxu0 %v1713
    %1777 = vmatpush.msra.mxu0 %v1712
    %1778 = vmatpush.msra.mxu0 %v1711
    %1779 = vmatpush.msra.mxu0 %v1710
    %1780 = vmatpush.msra.mxu0 %v1709
    %1781 = vmatpush.msra.mxu0 %v1708
    %1782 = vmatpush.msra.mxu0 %v1707
    %1783 = vmatpush.msra.mxu0 %v1706
    %1784 = vmatpush.msra.mxu0 %v1705
    %1785 = vmatpush.msra.mxu0 %v1704
    %1786 = vmatpush.msra.mxu0 %v1703
    %1787 = vmatmul.f32.gmra.mxu0 %v1684
    %v1788 = vpop.f32.mrf.mxu0
    %v1789 = vadd.f32 %v1769, %v1788
    %1790 = vdwg.mxu0
    %1791 = vmatpush.msra.mxu0 %v1734
    %1792 = vmatpush.msra.mxu0 %v1733
    %1793 = vmatpush.msra.mxu0 %v1732
    %1794 = vmatpush.msra.mxu0 %v1731
    %1795 = vmatpush.msra.mxu0 %v1730
    %1796 = vmatpush.msra.mxu0 %v1729
    %1797 = vmatpush.msra.mxu0 %v1728
    %1798 = vmatpush.msra.mxu0 %v1727
    %1799 = vmatpush.msra.mxu0 %v1726
    %1800 = vmatpush.msra.mxu0 %v1725
    %1801 = vmatpush.msra.mxu0 %v1724
    %1802 = vmatpush.msra.mxu0 %v1723
    %1803 = vmatpush.msra.mxu0 %v1722
    %1804 = vmatpush.msra.mxu0 %v1721
    %1805 = vmatpush.msra.mxu0 %v1720
    %1806 = vmatpush.msra.mxu0 %v1719
    %1807 = vmatmul.f32.gmra.mxu0 %v1685
    %v1808 = vpop.f32.mrf.mxu0
    %v1809 = vadd.f32 %v1789, %v1808
    %1810 = vdwg.mxu0
    %1811 = vmatpush.msra.mxu0 %v1750
    %1812 = vmatpush.msra.mxu0 %v1749
    %1813 = vmatpush.msra.mxu0 %v1748
    %1814 = vmatpush.msra.mxu0 %v1747
    %1815 = vmatpush.msra.mxu0 %v1746
    %1816 = vmatpush.msra.mxu0 %v1745
    %1817 = vmatpush.msra.mxu0 %v1744
    %1818 = vmatpush.msra.mxu0 %v1743
    %1819 = vmatpush.msra.mxu0 %v1742
    %1820 = vmatpush.msra.mxu0 %v1741
    %1821 = vmatpush.msra.mxu0 %v1740
    %1822 = vmatpush.msra.mxu0 %v1739
    %1823 = vmatpush.msra.mxu0 %v1738
    %1824 = vmatpush.msra.mxu0 %v1737
    %1825 = vmatpush.msra.mxu0 %v1736
    %1826 = vmatpush.msra.mxu0 %v1735
    %1827 = vmatmul.f32.gmra.mxu0 %v1686
    %v1828 = vpop.f32.mrf.mxu0
    %v1829 = vadd.f32 %v1809, %v1828
    %1830 = vdwg.mxu0
    %v1831 = vadd.f32 %v1467, %v1829
    %v1832 = vld [vmem:[#allocation7 + $0x54d] sm:$0x1]
    %v1833 = vperm.slane %v1832, 0
    %v1834 = vadd.f32 %v1831, %v1833
    %1836 = vrot.lane.b32.xlu0 %v1834, 64
    %v1837 = vpop.permute.xlu0 %1836
    %v1839 = vadd.f32 %v1834, %v1837
    %v1840 = vld [vmem:[#allocation7 + $0x552] sm:$0x1]
    %v1841 = vld [vmem:[#allocation7 + $0x553] sm:$0x1]
    %vm1842 = vcmask 523264
    %v1844 = vsel %vm1842, %v1839, 0
    %1846 = vmatpush.msra.mxu0 0.0
    %1847 = vmatpush.msra.mxu0 0.0
    %1848 = vmatpush.msra.mxu0 0.0
    %1849 = vmatpush.msra.mxu0 0.0
    %1850 = vmatpush.msra.mxu0 0.0
    %1851 = vmatpush.msra.mxu0 0.0
    %1852 = vmatpush.msra.mxu0 0.0
    %1853 = vmatpush.msra.mxu0 0.0
    %1854 = vmatpush.msra.mxu0 %v67
    %1855 = vmatpush.msra.mxu0 %v66
    %1856 = vmatpush.msra.mxu0 %v65
    %1857 = vmatpush.msra.mxu0 %v64
    %1858 = vmatpush.msra.mxu0 %v63
    %1859 = vmatpush.msra.mxu0 %v62
    %1860 = vmatpush.msra.mxu0 %v61
    %1861 = vmatpush.msra.mxu0 %v60
    %1862 = vmatmul.f32.gmra.mxu0 %v1844
    %v1863 = vpop.f32.mrf.mxu0
    %v1864 = vadd.f32 0.0, %v1863
    %1865 = vdwg.mxu0
    %v1866 = vsub.f32 %v1839, %v1864
    %v1867 = vmul.f32 %v1866, %v1866
    %v1869 = vsel %vm1842, %v1867, 0
    %1871 = vmatpush.msra.mxu0 0.0
    %1872 = vmatpush.msra.mxu0 0.0
    %1873 = vmatpush.msra.mxu0 0.0
    %1874 = vmatpush.msra.mxu0 0.0
    %1875 = vmatpush.msra.mxu0 0.0
    %1876 = vmatpush.msra.mxu0 0.0
    %1877 = vmatpush.msra.mxu0 0.0
    %1878 = vmatpush.msra.mxu0 0.0
    %1879 = vmatpush.msra.mxu0 %v67
    %1880 = vmatpush.msra.mxu0 %v66
    %1881 = vmatpush.msra.mxu0 %v65
    %1882 = vmatpush.msra.mxu0 %v64
    %1883 = vmatpush.msra.mxu0 %v63
    %1884 = vmatpush.msra.mxu0 %v62
    %1885 = vmatpush.msra.mxu0 %v61
    %1886 = vmatpush.msra.mxu0 %v60
    %1887 = vmatmul.f32.gmra.mxu0 %v1869
    %v1888 = vpop.f32.mrf.mxu0
    %v1889 = vadd.f32 1e-05, %v1888
    %1890 = vdwg.mxu0
    %v1891 = vrsqrt.pop %v1889
    %v1892 = vmul.f32 %v1891, %v1889
    %v1893 = vmul.f32 %v1892, %v1891
    %v1894 = vmul.f32 0.5, %v1893
    %v1895 = vsub.f32 1.5, %v1894
    %v1896 = vmul.f32 %v1891, %v1895
    %vm1897 = vweird.f32 %v1889
    %vm1898 = vweird.f32 %v1891
    %vm1899 = vmor %vm1897, %vm1898
    %v1900 = vsel %vm1899, %v1891, %v1896
    %v1901 = vmul.f32 %v1866, %v1900
    %v1902 = vperm.slane %v1840, 0
    %v1903 = vmul.f32 %v1901, %v1902
    %v1904 = vperm.slane %v1841, 0
    %v1905 = vadd.f32 %v1903, %v1904
    %1906 = vst.msk [vmem:[#allocation8] sm:$0xff] %vm1842, %v1905
    // Predicated region
    $region26: #{tpu_custom_call.1} parent=1 // pred_check
      _
    $region27: #{tpu_custom_call.1} parent=1 // pred_check_branch
      %1908 = sbr.rel (0) target = $region29
    $region28: #{tpu_custom_call.1} parent=1 // pred_region
      %1910 = vsyncadd [#allocation4], 0
      %s1912 = sshll.u32 [#allocation8], 4
      %s1913 = int_to_ptr.vmem [resolvable:$true] %s1912
      %s1914 = sshll.u32 %s3, 4
      %s1915 = int_to_ptr.hbm [resolvable:$true] %s1914
      %1917 = dma.vmem_to_hbm [thread:$0]  %s1913, 128, %s1915, [#allocation4]
    $region29: #{tpu_custom_call.1} parent=1 // pred_fallthru
      _
    // Predicated region
    $region30: #{tpu_custom_call.1} parent=1 // pred_check
      _
    $region31: #{tpu_custom_call.1} parent=1 // pred_check_branch
      %1919 = sbr.rel (0) target = $region33
    $region32: #{tpu_custom_call.1} parent=1 // pred_region
      %1921 = dma.done [#allocation4], 128
    $region33: #{tpu_custom_call.1} parent=1 // pred_fallthru
      _
    %1922 = vsyncpa [#allocation3], 1
    %1923 = vsyncpa [#allocation6], 1
    %1924 = vsyncpa [#allocation4], 1

</llo_original>
